<compile_context>
chip_gen: v6e
topology: v6e:2x2x1
jax: 0.10.0
libtpu: 0.0.40
codegen_flags: <defaults>
</compile_context>

<pallas_src>
import functools

import numpy as np

import jax
import jax.numpy as jnp
from jax.experimental import pallas as pl
from jax.experimental.pallas import tpu as pltpu

_EPS = 1e-5

# Packed-parameter segment table: (name, rows, cols).  Rows are padded to a
# multiple of 8 and cols to 128 when packing; the kernel slices by offset.
_SEGS = (
    ("w1e", 96, 96), ("w1o", 96, 96), ("a96", 96, 96), ("gb1", 2, 96),
    ("w2e", 288, 128), ("w2o", 288, 128), ("a128", 128, 128), ("gb2", 2, 128),
    ("fc1w", 1024, 128), ("fc1b", 1, 128),
    ("fc2w", 128, 128), ("fc2b", 1, 128),
    ("fc3w", 128, 128), ("fc3b", 1, 128),
)


def _seg_offsets():
    off, offs = 0, {}
    for name, r, _ in _SEGS:
        offs[name] = off
        off += ((r + 7) // 8) * 8
    return offs, off


_OFF, _PACK_ROWS = _seg_offsets()
_SEG_SHAPE = {name: (r, c) for name, r, c in _SEGS}


# ------------------------------ fused kernel -------------------------------

def _lenet_kernel(xq_ref, p_ref, out_ref, xcol_ref, lhs2_ref, *, n):
    f32 = jnp.float32

    def seg(name):
        o = _OFF[name]
        r, c = _SEG_SHAPE[name]
        return p_ref[o:o + r, 0:c]

    # -------- conv1 LHS: in-kernel im2col of the H taps --------------------
    # xcol[(ip, ihp, n, ihh), dh*32 + cin] = x[n, 4*ihh + 2*ihp + ip + dh - 1, cin]
    # xq_ref[q, n, r, :] holds input row 4*r + q.
    for ip in range(2):
        for ihp in range(2):
            g = ip * 2 + ihp
            for dh in range(3):
                r0 = 2 * ihp + ip + dh - 1
                lo = dh * 32
                if r0 == -1:      # input row -1 -> zero pad (only ip=ihp=dh=0)
                    xcol_ref[g, :, 0:1, lo:lo + 32] = jnp.zeros((n, 1, 32), f32)
                    xcol_ref[g, :, 1:8, lo:lo + 32] = xq_ref[3, :, 0:7, :]
                elif r0 == 4:     # input row 32 -> zero pad (only ip=ihp=1,dh=2)
                    xcol_ref[g, :, 7:8, lo:lo + 32] = jnp.zeros((n, 1, 32), f32)
                    xcol_ref[g, :, 0:7, lo:lo + 32] = xq_ref[0, :, 1:8, :]
                else:
                    xcol_ref[g, :, :, lo:lo + 32] = xq_ref[r0, :, :, :]

    xcol = xcol_ref[...].reshape(4 * n * 8, 96)     # rows (ip, ihp, n, ihh)

    # -------- conv1 (2 banded matmuls) + bn1 + 2x2 max-pool -----------------
    he = jnp.dot(xcol, seg("w1e"), preferred_element_type=f32)   # even cols
    ho = jnp.dot(xcol, seg("w1o"), preferred_element_type=f32)   # odd  cols

    cnt1 = float(n * 1024)
    s1 = jnp.sum(he, axis=0, keepdims=True) + jnp.sum(ho, axis=0, keepdims=True)
    q1 = (jnp.sum(he * he, axis=0, keepdims=True)
          + jnp.sum(ho * ho, axis=0, keepdims=True))
    g1 = jnp.dot(jnp.concatenate([s1, q1], axis=0), seg("a96"),
                 preferred_element_type=f32)        # per-channel, lane-broadcast
    mean1 = g1[0:1, :] / cnt1
    var1 = g1[1:2, :] / cnt1 - mean1 * mean1
    gb1 = seg("gb1")
    scale1 = jax.lax.rsqrt(var1 + _EPS) * gb1[0:1, :]
    shift1 = gb1[1:2, :] - mean1 * scale1

    pw = jnp.maximum(he * scale1 + shift1, ho * scale1 + shift1)  # pool over W
    pw = pw.reshape(2, 2 * n * 8, 96)                             # split by i%2
    pool1 = jnp.maximum(pw[0], pw[1])                             # pool over H
    pool1 = pool1.reshape(2, n, 8, 96)             # (ihp, n, ihh, (col, ch))

    # -------- conv2 LHS: im2col of the H taps from pool1 --------------------
    # lhs2[(ip2, n, y), dh*96 + jw*6 + ci] = pool1 at row ih = 2*y + ip2 + dh - 1
    for ip2 in range(2):
        for dh in range(3):
            t = ip2 + dh - 1
            lo = dh * 96
            if t == -1:           # row -1 -> zero pad (only ip2=0, dh=0)
                lhs2_ref[ip2, :, 0:1, lo:lo + 96] = jnp.zeros((n, 1, 96), f32)
                lhs2_ref[ip2, :, 1:8, lo:lo + 96] = pool1[1, :, 0:7, :]
            elif t == 2:          # row 16 -> zero pad (only ip2=1, dh=2)
                lhs2_ref[ip2, :, 7:8, lo:lo + 96] = jnp.zeros((n, 1, 96), f32)
                lhs2_ref[ip2, :, 0:7, lo:lo + 96] = pool1[0, :, 1:8, :]
            else:                 # ih = 2*y + t, parity t
                lhs2_ref[ip2, :, :, lo:lo + 96] = pool1[t, :, :, :]

    lhs2 = lhs2_ref[...].reshape(2 * n * 8, 288)    # rows (ip2, n, y)

    # -------- conv2 (2 banded matmuls) + bn2 + 2x2 max-pool ------------------
    oe = jnp.dot(lhs2, seg("w2e"), preferred_element_type=f32)
    oo = jnp.dot(lhs2, seg("w2o"), preferred_element_type=f32)

    cnt2 = float(n * 256)
    s2 = jnp.sum(oe, axis=0, keepdims=True) + jnp.sum(oo, axis=0, keepdims=True)
    q2 = (jnp.sum(oe * oe, axis=0, keepdims=True)
          + jnp.sum(oo * oo, axis=0, keepdims=True))
    g2 = jnp.dot(jnp.concatenate([s2, q2], axis=0), seg("a128"),
                 preferred_element_type=f32)
    mean2 = g2[0:1, :] / cnt2
    var2 = g2[1:2, :] / cnt2 - mean2 * mean2
    gb2 = seg("gb2")
    scale2 = jax.lax.rsqrt(var2 + _EPS) * gb2[0:1, :]
    shift2 = gb2[1:2, :] - mean2 * scale2

    pw2 = jnp.maximum(oe * scale2 + shift2, oo * scale2 + shift2)  # pool over W
    pw2 = pw2.reshape(2, n * 8, 128)                               # split by i2%2
    pooled = jnp.maximum(pw2[0], pw2[1]).reshape(n, 8, 128)        # (n, y, (x, co))

    # --------------------- fc1 + relu + fc2 + relu + fc3 ---------------------
    flat = jnp.concatenate([pooled[:, y, :] for y in range(8)], axis=1)  # (n,1024)
    h = jnp.maximum(jnp.dot(flat, seg("fc1w"), preferred_element_type=f32)
                    + seg("fc1b"), 0.0)
    h = jnp.maximum(jnp.dot(h, seg("fc2w"), preferred_element_type=f32)
                    + seg("fc2b"), 0.0)
    out = jnp.dot(h, seg("fc3w"), preferred_element_type=f32) + seg("fc3b")
    out_ref[...] = out[:, 0:10].astype(out_ref.dtype)


# ------------------------------ wrapper glue --------------------------------

def _pack_params(p):
    """Build all kernel-side weight layouts and pack them into one (R,128) f32."""
    w1_t = jnp.transpose(p["conv1_w"][:, 0, :, :], (1, 2, 0))      # (dh, dw, c)
    w2_t = jnp.transpose(p["conv2_w"], (2, 3, 1, 0))               # (dh, dw, ci, co)

    def band1(jp):   # conv1 banded weight for output columns j = 2*jh + jp
        sel = np.zeros((32, 3, 16), np.float32)
        for jh in range(16):
            for dw in range(3):
                cin = 2 * jh + jp + dw - 1
                if 0 <= cin < 32:
                    sel[cin, dw, jh] = 1.0
        return jnp.einsum("iwj,dwc->dijc", jnp.asarray(sel), w1_t).reshape(96, 96)

    def band2(jp):   # conv2 banded weight for output columns j2 = 2*x + jp
        sel = np.zeros((16, 3, 8), np.float32)
        for x in range(8):
            for dw in range(3):
                jw = 2 * x + jp + dw - 1
                if 0 <= jw < 16:
                    sel[jw, dw, x] = 1.0
        return jnp.einsum("jwx,dwio->djixo", jnp.asarray(sel), w2_t).reshape(288, 128)

    a96 = jnp.asarray((np.arange(96)[:, None] % 6
                       == np.arange(96)[None, :] % 6).astype(np.float32))
    a128 = jnp.asarray((np.arange(128)[:, None] % 16
                        == np.arange(128)[None, :] % 16).astype(np.float32))

    gb1 = jnp.stack([jnp.tile(p["bn1_g"], 16), jnp.tile(p["bn1_b"], 16)])   # (2,96)
    gb2 = jnp.stack([jnp.tile(p["bn2_g"], 8), jnp.tile(p["bn2_b"], 8)])     # (2,128)

    # fold PyTorch's NCHW flatten (c*64 + y*8 + x) into (y, x, c) row order
    fc1w = (p["fc1_w"].reshape(16, 8, 8, 120).transpose(1, 2, 0, 3)
            .reshape(1024, 120))
    built = {
        "w1e": band1(0), "w1o": band1(1), "a96": a96, "gb1": gb1,
        "w2e": band2(0), "w2o": band2(1), "a128": a128, "gb2": gb2,
        "fc1w": jnp.pad(fc1w, ((0, 0), (0, 8))),
        "fc1b": jnp.pad(p["fc1_b"].reshape(1, 120), ((0, 0), (0, 8))),
        "fc2w": jnp.pad(p["fc2_w"], ((0, 8), (0, 44))),
        "fc2b": jnp.pad(p["fc2_b"].reshape(1, 84), ((0, 0), (0, 44))),
        "fc3w": jnp.pad(p["fc3_w"], ((0, 44), (0, 118))),
        "fc3b": jnp.pad(p["fc3_b"].reshape(1, 10), ((0, 0), (0, 118))),
    }

    parts = []
    for name, rows, cols in _SEGS:
        a = built[name].astype(jnp.float32)
        assert a.shape == (rows, cols), (name, a.shape)
        rpad = ((rows + 7) // 8) * 8 - rows
        parts.append(jnp.pad(a, ((0, rpad), (0, 128 - cols))))
    return jnp.concatenate(parts, axis=0)            # (_PACK_ROWS, 128)


def lenet_forward(params, x):
    n, cin, hh, ww = x.shape
    assert (cin, hh, ww) == (1, 32, 32), "fc1 expects 16*8*8 = 1024 features"

    # input rows split by (row % 4): xq[q, n, r, :] = x[n, 4*r + q, :]
    xq = x.reshape(n, 8, 4, 32).transpose(2, 0, 1, 3).astype(jnp.float32)
    pack = _pack_params(params)

    return pl.pallas_call(
        functools.partial(_lenet_kernel, n=n),
        out_shape=jax.ShapeDtypeStruct((n, 10), jnp.float32),
        grid=(1,),
        in_specs=[
            pl.BlockSpec((4, n, 8, 32), lambda i: (0, 0, 0, 0)),
            pl.BlockSpec((_PACK_ROWS, 128), lambda i: (0, 0)),
        ],
        out_specs=pl.BlockSpec((n, 10), lambda i: (0, 0)),
        scratch_shapes=[
            pltpu.VMEM((4, n, 8, 96), jnp.float32),    # conv1 im2col LHS
            pltpu.VMEM((2, n, 8, 288), jnp.float32),   # conv2 im2col LHS
        ],
        compiler_params=pltpu.CompilerParams(
            dimension_semantics=("arbitrary",)),
    )(xq, pack)


# --------------------------- parameters / reference -------------------------

def init_params(key):
    ks = jax.random.split(key, 8)

    def nrm(k, shape, fan_in):
        return jax.random.normal(k, shape, jnp.float32) / jnp.sqrt(fan_in)

    return dict(
        conv1_w=nrm(ks[0], (6, 1, 3, 3), 9.0),                 # OIHW
        bn1_g=jnp.ones((6,), jnp.float32),
        bn1_b=jnp.zeros((6,), jnp.float32),
        conv2_w=nrm(ks[1], (16, 6, 3, 3), 54.0),
        bn2_g=jnp.ones((16,), jnp.float32),
        bn2_b=jnp.zeros((16,), jnp.float32),
        fc1_w=nrm(ks[2], (1024, 120), 1024.0),                 # (in, out)
        fc1_b=0.01 * jax.random.normal(ks[3], (120,), jnp.float32),
        fc2_w=nrm(ks[4], (120, 84), 120.0),
        fc2_b=0.01 * jax.random.normal(ks[5], (84,), jnp.float32),
        fc3_w=nrm(ks[6], (84, 10), 84.0),
        fc3_b=0.01 * jax.random.normal(ks[7], (10,), jnp.float32),
    )


def lenet_reference(params, x):
    hp = jax.lax.Precision.HIGHEST

    def conv(x, w):
        return jax.lax.conv_general_dilated(
            x, w, (1, 1), ((1, 1), (1, 1)),
            dimension_numbers=("NCHW", "OIHW", "NCHW"), precision=hp)

    def bn(x, g, b, eps=_EPS):
        mean = jnp.mean(x, axis=(0, 2, 3), keepdims=True)
        var = jnp.mean(jnp.square(x - mean), axis=(0, 2, 3), keepdims=True)
        return ((x - mean) * jax.lax.rsqrt(var + eps)
                * g.reshape(1, -1, 1, 1) + b.reshape(1, -1, 1, 1))

    def pool(x):
        n, c, h, w = x.shape
        return jnp.max(x.reshape(n, c, h // 2, 2, w // 2, 2), axis=(3, 5))

    h = pool(bn(conv(x, params["conv1_w"]), params["bn1_g"], params["bn1_b"]))
    h = pool(bn(conv(h, params["conv2_w"]), params["bn2_g"], params["bn2_b"]))
    h = h.reshape(-1, 1024)
    h = jax.nn.relu(jnp.dot(h, params["fc1_w"], precision=hp) + params["fc1_b"])
    h = jax.nn.relu(jnp.dot(h, params["fc2_w"], precision=hp) + params["fc2_b"])
    return jnp.dot(h, params["fc3_w"], precision=hp) + params["fc3_b"]


# ----------------------------------- main ------------------------------------

if __name__ == "__main__":
    key = jax.random.PRNGKey(0)
    kp, kx = jax.random.split(key)
    params = init_params(kp)

    # fc1 expects 1024 = 16 * 8 * 8 features -> input must be (N, 1, 32, 32)
    x = jax.random.normal(kx, (2, 1, 32, 32), jnp.float32)

    out = jax.block_until_ready(jax.jit(lenet_forward)(params, x))
    assert out.shape == (2, 10) and out.dtype == jnp.float32

    ref = jax.block_until_ready(lenet_reference(params, x))
    assert jnp.allclose(out, ref, rtol=1e-2, atol=1e-2), (
        f"max abs diff {jnp.max(jnp.abs(out - ref))}")

    print("KERNEL_OK")
</pallas_src>

<mosaic_0001>
module attributes {stable_mosaic.version = 11 : i64} {
  func.func @_lenet_kernel(%arg0: i32, %arg1: memref<4x2x8x32xf32, #tpu.memory_space<vmem>>, %arg2: memref<2312x128xf32, #tpu.memory_space<vmem>>, %arg3: memref<2x10xf32, #tpu.memory_space<vmem>>, %arg4: memref<4x2x8x96xf32, #tpu.memory_space<vmem>>, %arg5: memref<2x2x8x288xf32, #tpu.memory_space<vmem>>) attributes {dimension_semantics = [#tpu.dimension_semantics<arbitrary>], iteration_bounds = array<i64: 1>, scalar_prefetch = 0 : i64, scratch_operands = 2 : i64, tpu.core_type = #tpu.core_type<tc>, window_params = [{pipeline_mode = #tpu.pipeline_mode<synchronous>, transform_indices = @transform_0, window_bounds = array<i64: 4, 2, 8, 32>}, {pipeline_mode = #tpu.pipeline_mode<synchronous>, transform_indices = @transform_1, window_bounds = array<i64: 2312, 128>}, {pipeline_mode = #tpu.pipeline_mode<synchronous>, transform_indices = @transform_2, window_bounds = array<i64: 2, 10>}]} {
    %cst = arith.constant 0.000000e+00 : f32
    %0 = vector.broadcast %cst : f32 to vector<2x1x32xf32>
    %c0 = arith.constant 0 : index
    %c0_0 = arith.constant 0 : index
    %c0_1 = arith.constant 0 : index
    %c0_2 = arith.constant 0 : index
    %1 = vector.load %arg4[%c0, %c0_0, %c0_1, %c0_2] : memref<4x2x8x96xf32, #tpu.memory_space<vmem>>, vector<1x2x1x32xf32>
    %2 = vector.shape_cast %1 : vector<1x2x1x32xf32> to vector<2x1x32xf32>
    %3 = vector.shape_cast %0 : vector<2x1x32xf32> to vector<1x2x1x32xf32>
    tpu.vector_store %arg4[%c0, %c0_0, %c0_1, %c0_2], %3 {strides = array<i32>} : memref<4x2x8x96xf32, #tpu.memory_space<vmem>>, vector<1x2x1x32xf32>,
    %c3 = arith.constant 3 : index
    %c0_3 = arith.constant 0 : index
    %c0_4 = arith.constant 0 : index
    %c0_5 = arith.constant 0 : index
    %4 = vector.load %arg1[%c3, %c0_3, %c0_4, %c0_5] : memref<4x2x8x32xf32, #tpu.memory_space<vmem>>, vector<1x2x7x32xf32>
    %5 = vector.shape_cast %4 : vector<1x2x7x32xf32> to vector<2x7x32xf32>
    %c0_6 = arith.constant 0 : index
    %c0_7 = arith.constant 0 : index
    %c1 = arith.constant 1 : index
    %c0_8 = arith.constant 0 : index
    %6 = vector.load %arg4[%c0_6, %c0_7, %c1, %c0_8] : memref<4x2x8x96xf32, #tpu.memory_space<vmem>>, vector<1x2x7x32xf32>
    %7 = vector.shape_cast %6 : vector<1x2x7x32xf32> to vector<2x7x32xf32>
    %8 = vector.shape_cast %5 : vector<2x7x32xf32> to vector<1x2x7x32xf32>
    tpu.vector_store %arg4[%c0_6, %c0_7, %c1, %c0_8], %8 {strides = array<i32>} : memref<4x2x8x96xf32, #tpu.memory_space<vmem>>, vector<1x2x7x32xf32>,
    %c0_9 = arith.constant 0 : index
    %c0_10 = arith.constant 0 : index
    %c0_11 = arith.constant 0 : index
    %c0_12 = arith.constant 0 : index
    %9 = vector.load %arg1[%c0_9, %c0_10, %c0_11, %c0_12] : memref<4x2x8x32xf32, #tpu.memory_space<vmem>>, vector<1x2x8x32xf32>
    %10 = vector.shape_cast %9 : vector<1x2x8x32xf32> to vector<2x8x32xf32>
    %c0_13 = arith.constant 0 : index
    %c0_14 = arith.constant 0 : index
    %c0_15 = arith.constant 0 : index
    %c32 = arith.constant 32 : index
    %11 = vector.load %arg4[%c0_13, %c0_14, %c0_15, %c32] : memref<4x2x8x96xf32, #tpu.memory_space<vmem>>, vector<1x2x8x32xf32>
    %12 = vector.shape_cast %11 : vector<1x2x8x32xf32> to vector<2x8x32xf32>
    %13 = vector.shape_cast %10 : vector<2x8x32xf32> to vector<1x2x8x32xf32>
    tpu.vector_store %arg4[%c0_13, %c0_14, %c0_15, %c32], %13 {strides = array<i32>} : memref<4x2x8x96xf32, #tpu.memory_space<vmem>>, vector<1x2x8x32xf32>,
    %c1_16 = arith.constant 1 : index
    %c0_17 = arith.constant 0 : index
    %c0_18 = arith.constant 0 : index
    %c0_19 = arith.constant 0 : index
    %14 = vector.load %arg1[%c1_16, %c0_17, %c0_18, %c0_19] : memref<4x2x8x32xf32, #tpu.memory_space<vmem>>, vector<1x2x8x32xf32>
    %15 = vector.shape_cast %14 : vector<1x2x8x32xf32> to vector<2x8x32xf32>
    %c0_20 = arith.constant 0 : index
    %c0_21 = arith.constant 0 : index
    %c0_22 = arith.constant 0 : index
    %c64 = arith.constant 64 : index
    %16 = vector.load %arg4[%c0_20, %c0_21, %c0_22, %c64] : memref<4x2x8x96xf32, #tpu.memory_space<vmem>>, vector<1x2x8x32xf32>
    %17 = vector.shape_cast %16 : vector<1x2x8x32xf32> to vector<2x8x32xf32>
    %18 = vector.shape_cast %15 : vector<2x8x32xf32> to vector<1x2x8x32xf32>
    tpu.vector_store %arg4[%c0_20, %c0_21, %c0_22, %c64], %18 {strides = array<i32>} : memref<4x2x8x96xf32, #tpu.memory_space<vmem>>, vector<1x2x8x32xf32>,
    %c1_23 = arith.constant 1 : index
    %c0_24 = arith.constant 0 : index
    %c0_25 = arith.constant 0 : index
    %c0_26 = arith.constant 0 : index
    %19 = vector.load %arg1[%c1_23, %c0_24, %c0_25, %c0_26] : memref<4x2x8x32xf32, #tpu.memory_space<vmem>>, vector<1x2x8x32xf32>
    %20 = vector.shape_cast %19 : vector<1x2x8x32xf32> to vector<2x8x32xf32>
    %c1_27 = arith.constant 1 : index
    %c0_28 = arith.constant 0 : index
    %c0_29 = arith.constant 0 : index
    %c0_30 = arith.constant 0 : index
    %21 = vector.load %arg4[%c1_27, %c0_28, %c0_29, %c0_30] : memref<4x2x8x96xf32, #tpu.memory_space<vmem>>, vector<1x2x8x32xf32>
    %22 = vector.shape_cast %21 : vector<1x2x8x32xf32> to vector<2x8x32xf32>
    %23 = vector.shape_cast %20 : vector<2x8x32xf32> to vector<1x2x8x32xf32>
    tpu.vector_store %arg4[%c1_27, %c0_28, %c0_29, %c0_30], %23 {strides = array<i32>} : memref<4x2x8x96xf32, #tpu.memory_space<vmem>>, vector<1x2x8x32xf32>,
    %c2 = arith.constant 2 : index
    %c0_31 = arith.constant 0 : index
    %c0_32 = arith.constant 0 : index
    %c0_33 = arith.constant 0 : index
    %24 = vector.load %arg1[%c2, %c0_31, %c0_32, %c0_33] : memref<4x2x8x32xf32, #tpu.memory_space<vmem>>, vector<1x2x8x32xf32>
    %25 = vector.shape_cast %24 : vector<1x2x8x32xf32> to vector<2x8x32xf32>
    %c1_34 = arith.constant 1 : index
    %c0_35 = arith.constant 0 : index
    %c0_36 = arith.constant 0 : index
    %c32_37 = arith.constant 32 : index
    %26 = vector.load %arg4[%c1_34, %c0_35, %c0_36, %c32_37] : memref<4x2x8x96xf32, #tpu.memory_space<vmem>>, vector<1x2x8x32xf32>
    %27 = vector.shape_cast %26 : vector<1x2x8x32xf32> to vector<2x8x32xf32>
    %28 = vector.shape_cast %25 : vector<2x8x32xf32> to vector<1x2x8x32xf32>
    tpu.vector_store %arg4[%c1_34, %c0_35, %c0_36, %c32_37], %28 {strides = array<i32>} : memref<4x2x8x96xf32, #tpu.memory_space<vmem>>, vector<1x2x8x32xf32>,
    %c3_38 = arith.constant 3 : index
    %c0_39 = arith.constant 0 : index
    %c0_40 = arith.constant 0 : index
    %c0_41 = arith.constant 0 : index
    %29 = vector.load %arg1[%c3_38, %c0_39, %c0_40, %c0_41] : memref<4x2x8x32xf32, #tpu.memory_space<vmem>>, vector<1x2x8x32xf32>
    %30 = vector.shape_cast %29 : vector<1x2x8x32xf32> to vector<2x8x32xf32>
    %c1_42 = arith.constant 1 : index
    %c0_43 = arith.constant 0 : index
    %c0_44 = arith.constant 0 : index
    %c64_45 = arith.constant 64 : index
    %31 = vector.load %arg4[%c1_42, %c0_43, %c0_44, %c64_45] : memref<4x2x8x96xf32, #tpu.memory_space<vmem>>, vector<1x2x8x32xf32>
    %32 = vector.shape_cast %31 : vector<1x2x8x32xf32> to vector<2x8x32xf32>
    %33 = vector.shape_cast %30 : vector<2x8x32xf32> to vector<1x2x8x32xf32>
    tpu.vector_store %arg4[%c1_42, %c0_43, %c0_44, %c64_45], %33 {strides = array<i32>} : memref<4x2x8x96xf32, #tpu.memory_space<vmem>>, vector<1x2x8x32xf32>,
    %c0_46 = arith.constant 0 : index
    %c0_47 = arith.constant 0 : index
    %c0_48 = arith.constant 0 : index
    %c0_49 = arith.constant 0 : index
    %34 = vector.load %arg1[%c0_46, %c0_47, %c0_48, %c0_49] : memref<4x2x8x32xf32, #tpu.memory_space<vmem>>, vector<1x2x8x32xf32>
    %35 = vector.shape_cast %34 : vector<1x2x8x32xf32> to vector<2x8x32xf32>
    %c2_50 = arith.constant 2 : index
    %c0_51 = arith.constant 0 : index
    %c0_52 = arith.constant 0 : index
    %c0_53 = arith.constant 0 : index
    %36 = vector.load %arg4[%c2_50, %c0_51, %c0_52, %c0_53] : memref<4x2x8x96xf32, #tpu.memory_space<vmem>>, vector<1x2x8x32xf32>
    %37 = vector.shape_cast %36 : vector<1x2x8x32xf32> to vector<2x8x32xf32>
    %38 = vector.shape_cast %35 : vector<2x8x32xf32> to vector<1x2x8x32xf32>
    tpu.vector_store %arg4[%c2_50, %c0_51, %c0_52, %c0_53], %38 {strides = array<i32>} : memref<4x2x8x96xf32, #tpu.memory_space<vmem>>, vector<1x2x8x32xf32>,
    %c1_54 = arith.constant 1 : index
    %c0_55 = arith.constant 0 : index
    %c0_56 = arith.constant 0 : index
    %c0_57 = arith.constant 0 : index
    %39 = vector.load %arg1[%c1_54, %c0_55, %c0_56, %c0_57] : memref<4x2x8x32xf32, #tpu.memory_space<vmem>>, vector<1x2x8x32xf32>
    %40 = vector.shape_cast %39 : vector<1x2x8x32xf32> to vector<2x8x32xf32>
    %c2_58 = arith.constant 2 : index
    %c0_59 = arith.constant 0 : index
    %c0_60 = arith.constant 0 : index
    %c32_61 = arith.constant 32 : index
    %41 = vector.load %arg4[%c2_58, %c0_59, %c0_60, %c32_61] : memref<4x2x8x96xf32, #tpu.memory_space<vmem>>, vector<1x2x8x32xf32>
    %42 = vector.shape_cast %41 : vector<1x2x8x32xf32> to vector<2x8x32xf32>
    %43 = vector.shape_cast %40 : vector<2x8x32xf32> to vector<1x2x8x32xf32>
    tpu.vector_store %arg4[%c2_58, %c0_59, %c0_60, %c32_61], %43 {strides = array<i32>} : memref<4x2x8x96xf32, #tpu.memory_space<vmem>>, vector<1x2x8x32xf32>,
    %c2_62 = arith.constant 2 : index
    %c0_63 = arith.constant 0 : index
    %c0_64 = arith.constant 0 : index
    %c0_65 = arith.constant 0 : index
    %44 = vector.load %arg1[%c2_62, %c0_63, %c0_64, %c0_65] : memref<4x2x8x32xf32, #tpu.memory_space<vmem>>, vector<1x2x8x32xf32>
    %45 = vector.shape_cast %44 : vector<1x2x8x32xf32> to vector<2x8x32xf32>
    %c2_66 = arith.constant 2 : index
    %c0_67 = arith.constant 0 : index
    %c0_68 = arith.constant 0 : index
    %c64_69 = arith.constant 64 : index
    %46 = vector.load %arg4[%c2_66, %c0_67, %c0_68, %c64_69] : memref<4x2x8x96xf32, #tpu.memory_space<vmem>>, vector<1x2x8x32xf32>
    %47 = vector.shape_cast %46 : vector<1x2x8x32xf32> to vector<2x8x32xf32>
    %48 = vector.shape_cast %45 : vector<2x8x32xf32> to vector<1x2x8x32xf32>
    tpu.vector_store %arg4[%c2_66, %c0_67, %c0_68, %c64_69], %48 {strides = array<i32>} : memref<4x2x8x96xf32, #tpu.memory_space<vmem>>, vector<1x2x8x32xf32>,
    %c2_70 = arith.constant 2 : index
    %c0_71 = arith.constant 0 : index
    %c0_72 = arith.constant 0 : index
    %c0_73 = arith.constant 0 : index
    %49 = vector.load %arg1[%c2_70, %c0_71, %c0_72, %c0_73] : memref<4x2x8x32xf32, #tpu.memory_space<vmem>>, vector<1x2x8x32xf32>
    %50 = vector.shape_cast %49 : vector<1x2x8x32xf32> to vector<2x8x32xf32>
    %c3_74 = arith.constant 3 : index
    %c0_75 = arith.constant 0 : index
    %c0_76 = arith.constant 0 : index
    %c0_77 = arith.constant 0 : index
    %51 = vector.load %arg4[%c3_74, %c0_75, %c0_76, %c0_77] : memref<4x2x8x96xf32, #tpu.memory_space<vmem>>, vector<1x2x8x32xf32>
    %52 = vector.shape_cast %51 : vector<1x2x8x32xf32> to vector<2x8x32xf32>
    %53 = vector.shape_cast %50 : vector<2x8x32xf32> to vector<1x2x8x32xf32>
    tpu.vector_store %arg4[%c3_74, %c0_75, %c0_76, %c0_77], %53 {strides = array<i32>} : memref<4x2x8x96xf32, #tpu.memory_space<vmem>>, vector<1x2x8x32xf32>,
    %c3_78 = arith.constant 3 : index
    %c0_79 = arith.constant 0 : index
    %c0_80 = arith.constant 0 : index
    %c0_81 = arith.constant 0 : index
    %54 = vector.load %arg1[%c3_78, %c0_79, %c0_80, %c0_81] : memref<4x2x8x32xf32, #tpu.memory_space<vmem>>, vector<1x2x8x32xf32>
    %55 = vector.shape_cast %54 : vector<1x2x8x32xf32> to vector<2x8x32xf32>
    %c3_82 = arith.constant 3 : index
    %c0_83 = arith.constant 0 : index
    %c0_84 = arith.constant 0 : index
    %c32_85 = arith.constant 32 : index
    %56 = vector.load %arg4[%c3_82, %c0_83, %c0_84, %c32_85] : memref<4x2x8x96xf32, #tpu.memory_space<vmem>>, vector<1x2x8x32xf32>
    %57 = vector.shape_cast %56 : vector<1x2x8x32xf32> to vector<2x8x32xf32>
    %58 = vector.shape_cast %55 : vector<2x8x32xf32> to vector<1x2x8x32xf32>
    tpu.vector_store %arg4[%c3_82, %c0_83, %c0_84, %c32_85], %58 {strides = array<i32>} : memref<4x2x8x96xf32, #tpu.memory_space<vmem>>, vector<1x2x8x32xf32>,
    %cst_86 = arith.constant 0.000000e+00 : f32
    %59 = vector.broadcast %cst_86 : f32 to vector<2x1x32xf32>
    %c3_87 = arith.constant 3 : index
    %c0_88 = arith.constant 0 : index
    %c7 = arith.constant 7 : index
    %c64_89 = arith.constant 64 : index
    %60 = vector.load %arg4[%c3_87, %c0_88, %c7, %c64_89] : memref<4x2x8x96xf32, #tpu.memory_space<vmem>>, vector<1x2x1x32xf32>
    %61 = vector.shape_cast %60 : vector<1x2x1x32xf32> to vector<2x1x32xf32>
    %62 = vector.shape_cast %59 : vector<2x1x32xf32> to vector<1x2x1x32xf32>
    tpu.vector_store %arg4[%c3_87, %c0_88, %c7, %c64_89], %62 {strides = array<i32>} : memref<4x2x8x96xf32, #tpu.memory_space<vmem>>, vector<1x2x1x32xf32>,
    %c0_90 = arith.constant 0 : index
    %c0_91 = arith.constant 0 : index
    %c1_92 = arith.constant 1 : index
    %c0_93 = arith.constant 0 : index
    %63 = vector.load %arg1[%c0_90, %c0_91, %c1_92, %c0_93] : memref<4x2x8x32xf32, #tpu.memory_space<vmem>>, vector<1x2x7x32xf32>
    %64 = vector.shape_cast %63 : vector<1x2x7x32xf32> to vector<2x7x32xf32>
    %c3_94 = arith.constant 3 : index
    %c0_95 = arith.constant 0 : index
    %c0_96 = arith.constant 0 : index
    %c64_97 = arith.constant 64 : index
    %65 = vector.load %arg4[%c3_94, %c0_95, %c0_96, %c64_97] : memref<4x2x8x96xf32, #tpu.memory_space<vmem>>, vector<1x2x7x32xf32>
    %66 = vector.shape_cast %65 : vector<1x2x7x32xf32> to vector<2x7x32xf32>
    %67 = vector.shape_cast %64 : vector<2x7x32xf32> to vector<1x2x7x32xf32>
    tpu.vector_store %arg4[%c3_94, %c0_95, %c0_96, %c64_97], %67 {strides = array<i32>} : memref<4x2x8x96xf32, #tpu.memory_space<vmem>>, vector<1x2x7x32xf32>,
    %c0_98 = arith.constant 0 : index
    %c0_99 = arith.constant 0 : index
    %c0_100 = arith.constant 0 : index
    %c0_101 = arith.constant 0 : index
    %68 = vector.load %arg4[%c0_98, %c0_99, %c0_100, %c0_101] : memref<4x2x8x96xf32, #tpu.memory_space<vmem>>, vector<4x2x8x96xf32>
    %69 = vector.shape_cast %68 : vector<4x2x8x96xf32> to vector<64x96xf32>
    %c0_102 = arith.constant 0 : index
    %c0_103 = arith.constant 0 : index
    %70 = vector.load %arg2[%c0_102, %c0_103] : memref<2312x128xf32, #tpu.memory_space<vmem>>, vector<96x96xf32>
    %cst_104 = arith.constant dense<0.000000e+00> : vector<64x96xf32>
    %71 = tpu.matmul %69, %70, %cst_104 {dimension_numbers = #tpu.dot_dimension_numbers<[1], [0], [0], [1], [0, 0, 1, 1], [], []>} : vector<64x96xf32>, vector<96x96xf32>, vector<64x96xf32> -> vector<64x96xf32>
    %c96 = arith.constant 96 : index
    %c0_105 = arith.constant 0 : index
    %72 = vector.load %arg2[%c96, %c0_105] : memref<2312x128xf32, #tpu.memory_space<vmem>>, vector<96x96xf32>
    %cst_106 = arith.constant dense<0.000000e+00> : vector<64x96xf32>
    %73 = tpu.matmul %69, %72, %cst_106 {dimension_numbers = #tpu.dot_dimension_numbers<[1], [0], [0], [1], [0, 0, 1, 1], [], []>} : vector<64x96xf32>, vector<96x96xf32>, vector<64x96xf32> -> vector<64x96xf32>
    %cst_107 = arith.constant dense<0.000000e+00> : vector<96xf32>
    %74 = vector.multi_reduction <add>, %71, %cst_107 [0] : vector<64x96xf32> to vector<96xf32>
    %75 = vector.shape_cast %74 : vector<96xf32> to vector<1x96xf32>
    %cst_108 = arith.constant dense<0.000000e+00> : vector<96xf32>
    %76 = vector.multi_reduction <add>, %73, %cst_108 [0] : vector<64x96xf32> to vector<96xf32>
    %77 = vector.shape_cast %76 : vector<96xf32> to vector<1x96xf32>
    %78 = arith.addf %75, %77 : vector<1x96xf32>
    %79 = arith.mulf %71, %71 : vector<64x96xf32>
    %cst_109 = arith.constant dense<0.000000e+00> : vector<96xf32>
    %80 = vector.multi_reduction <add>, %79, %cst_109 [0] : vector<64x96xf32> to vector<96xf32>
    %81 = vector.shape_cast %80 : vector<96xf32> to vector<1x96xf32>
    %82 = arith.mulf %73, %73 : vector<64x96xf32>
    %cst_110 = arith.constant dense<0.000000e+00> : vector<96xf32>
    %83 = vector.multi_reduction <add>, %82, %cst_110 [0] : vector<64x96xf32> to vector<96xf32>
    %84 = vector.shape_cast %83 : vector<96xf32> to vector<1x96xf32>
    %85 = arith.addf %81, %84 : vector<1x96xf32>
    %86 = tpu.concatenate %78, %85 in 0 : vector<1x96xf32>, vector<1x96xf32> -> vector<2x96xf32>
    %c192 = arith.constant 192 : index
    %c0_111 = arith.constant 0 : index
    %87 = vector.load %arg2[%c192, %c0_111] : memref<2312x128xf32, #tpu.memory_space<vmem>>, vector<96x96xf32>
    %cst_112 = arith.constant dense<0.000000e+00> : vector<2x96xf32>
    %88 = tpu.matmul %86, %87, %cst_112 {dimension_numbers = #tpu.dot_dimension_numbers<[1], [0], [0], [1], [0, 0, 1, 1], [], []>} : vector<2x96xf32>, vector<96x96xf32>, vector<2x96xf32> -> vector<2x96xf32>
    %89 = vector.extract_strided_slice %88 {offsets = [0, 0], sizes = [1, 96], strides = [1, 1]} : vector<2x96xf32> to vector<1x96xf32>
    %cst_113 = arith.constant 2.048000e+03 : f32
    %90 = vector.broadcast %cst_113 : f32 to vector<1x96xf32>
    %91 = arith.divf %89, %90 : vector<1x96xf32>
    %92 = vector.extract_strided_slice %88 {offsets = [1, 0], sizes = [1, 96], strides = [1, 1]} : vector<2x96xf32> to vector<1x96xf32>
    %cst_114 = arith.constant 2.048000e+03 : f32
    %93 = vector.broadcast %cst_114 : f32 to vector<1x96xf32>
    %94 = arith.divf %92, %93 : vector<1x96xf32>
    %95 = arith.mulf %91, %91 : vector<1x96xf32>
    %96 = arith.subf %94, %95 : vector<1x96xf32>
    %c288 = arith.constant 288 : index
    %c0_115 = arith.constant 0 : index
    %97 = vector.load %arg2[%c288, %c0_115] : memref<2312x128xf32, #tpu.memory_space<vmem>>, vector<2x96xf32>
    %cst_116 = arith.constant 9.99999974E-6 : f32
    %98 = vector.broadcast %cst_116 : f32 to vector<1x96xf32>
    %99 = arith.addf %96, %98 : vector<1x96xf32>
    %100 = math.rsqrt %99 : vector<1x96xf32>
    %101 = vector.extract_strided_slice %97 {offsets = [0, 0], sizes = [1, 96], strides = [1, 1]} : vector<2x96xf32> to vector<1x96xf32>
    %102 = arith.mulf %100, %101 : vector<1x96xf32>
    %103 = vector.extract_strided_slice %97 {offsets = [1, 0], sizes = [1, 96], strides = [1, 1]} : vector<2x96xf32> to vector<1x96xf32>
    %104 = arith.mulf %91, %102 : vector<1x96xf32>
    %105 = arith.subf %103, %104 : vector<1x96xf32>
    %106 = vector.broadcast %102 : vector<1x96xf32> to vector<64x96xf32>
    %107 = arith.mulf %71, %106 : vector<64x96xf32>
    %108 = vector.broadcast %105 : vector<1x96xf32> to vector<64x96xf32>
    %109 = arith.addf %107, %108 : vector<64x96xf32>
    %110 = vector.broadcast %102 : vector<1x96xf32> to vector<64x96xf32>
    %111 = arith.mulf %73, %110 : vector<64x96xf32>
    %112 = vector.broadcast %105 : vector<1x96xf32> to vector<64x96xf32>
    %113 = arith.addf %111, %112 : vector<64x96xf32>
    %114 = arith.maximumf %109, %113 : vector<64x96xf32>
    %115 = vector.shape_cast %114 : vector<64x96xf32> to vector<2x32x96xf32>
    %116 = vector.extract_strided_slice %115 {offsets = [0, 0, 0], sizes = [1, 32, 96], strides = [1, 1, 1]} : vector<2x32x96xf32> to vector<1x32x96xf32>
    %117 = vector.shape_cast %116 : vector<1x32x96xf32> to vector<32x96xf32>
    %118 = vector.extract_strided_slice %115 {offsets = [1, 0, 0], sizes = [1, 32, 96], strides = [1, 1, 1]} : vector<2x32x96xf32> to vector<1x32x96xf32>
    %119 = vector.shape_cast %118 : vector<1x32x96xf32> to vector<32x96xf32>
    %120 = arith.maximumf %117, %119 : vector<32x96xf32>
    %121 = vector.shape_cast %120 : vector<32x96xf32> to vector<2x2x8x96xf32>
    %cst_117 = arith.constant 0.000000e+00 : f32
    %122 = vector.broadcast %cst_117 : f32 to vector<2x1x96xf32>
    %c0_118 = arith.constant 0 : index
    %c0_119 = arith.constant 0 : index
    %c0_120 = arith.constant 0 : index
    %c0_121 = arith.constant 0 : index
    %123 = vector.load %arg5[%c0_118, %c0_119, %c0_120, %c0_121] : memref<2x2x8x288xf32, #tpu.memory_space<vmem>>, vector<1x2x1x96xf32>
    %124 = vector.shape_cast %123 : vector<1x2x1x96xf32> to vector<2x1x96xf32>
    %125 = vector.shape_cast %122 : vector<2x1x96xf32> to vector<1x2x1x96xf32>
    tpu.vector_store %arg5[%c0_118, %c0_119, %c0_120, %c0_121], %125 {strides = array<i32>} : memref<2x2x8x288xf32, #tpu.memory_space<vmem>>, vector<1x2x1x96xf32>,
    %126 = vector.extract_strided_slice %121 {offsets = [1, 0, 0, 0], sizes = [1, 2, 7, 96], strides = [1, 1, 1, 1]} : vector<2x2x8x96xf32> to vector<1x2x7x96xf32>
    %127 = vector.shape_cast %126 : vector<1x2x7x96xf32> to vector<2x7x96xf32>
    %c0_122 = arith.constant 0 : index
    %c0_123 = arith.constant 0 : index
    %c1_124 = arith.constant 1 : index
    %c0_125 = arith.constant 0 : index
    %128 = vector.load %arg5[%c0_122, %c0_123, %c1_124, %c0_125] : memref<2x2x8x288xf32, #tpu.memory_space<vmem>>, vector<1x2x7x96xf32>
    %129 = vector.shape_cast %128 : vector<1x2x7x96xf32> to vector<2x7x96xf32>
    %130 = vector.shape_cast %127 : vector<2x7x96xf32> to vector<1x2x7x96xf32>
    tpu.vector_store %arg5[%c0_122, %c0_123, %c1_124, %c0_125], %130 {strides = array<i32>} : memref<2x2x8x288xf32, #tpu.memory_space<vmem>>, vector<1x2x7x96xf32>,
    %131 = vector.extract_strided_slice %121 {offsets = [0, 0, 0, 0], sizes = [1, 2, 8, 96], strides = [1, 1, 1, 1]} : vector<2x2x8x96xf32> to vector<1x2x8x96xf32>
    %132 = vector.shape_cast %131 : vector<1x2x8x96xf32> to vector<2x8x96xf32>
    %c0_126 = arith.constant 0 : index
    %c0_127 = arith.constant 0 : index
    %c0_128 = arith.constant 0 : index
    %c96_129 = arith.constant 96 : index
    %133 = vector.load %arg5[%c0_126, %c0_127, %c0_128, %c96_129] : memref<2x2x8x288xf32, #tpu.memory_space<vmem>>, vector<1x2x8x96xf32>
    %134 = vector.shape_cast %133 : vector<1x2x8x96xf32> to vector<2x8x96xf32>
    %135 = vector.shape_cast %132 : vector<2x8x96xf32> to vector<1x2x8x96xf32>
    tpu.vector_store %arg5[%c0_126, %c0_127, %c0_128, %c96_129], %135 {strides = array<i32>} : memref<2x2x8x288xf32, #tpu.memory_space<vmem>>, vector<1x2x8x96xf32>,
    %136 = vector.extract_strided_slice %121 {offsets = [1, 0, 0, 0], sizes = [1, 2, 8, 96], strides = [1, 1, 1, 1]} : vector<2x2x8x96xf32> to vector<1x2x8x96xf32>
    %137 = vector.shape_cast %136 : vector<1x2x8x96xf32> to vector<2x8x96xf32>
    %c0_130 = arith.constant 0 : index
    %c0_131 = arith.constant 0 : index
    %c0_132 = arith.constant 0 : index
    %c192_133 = arith.constant 192 : index
    %138 = vector.load %arg5[%c0_130, %c0_131, %c0_132, %c192_133] : memref<2x2x8x288xf32, #tpu.memory_space<vmem>>, vector<1x2x8x96xf32>
    %139 = vector.shape_cast %138 : vector<1x2x8x96xf32> to vector<2x8x96xf32>
    %140 = vector.shape_cast %137 : vector<2x8x96xf32> to vector<1x2x8x96xf32>
    tpu.vector_store %arg5[%c0_130, %c0_131, %c0_132, %c192_133], %140 {strides = array<i32>} : memref<2x2x8x288xf32, #tpu.memory_space<vmem>>, vector<1x2x8x96xf32>,
    %141 = vector.extract_strided_slice %121 {offsets = [0, 0, 0, 0], sizes = [1, 2, 8, 96], strides = [1, 1, 1, 1]} : vector<2x2x8x96xf32> to vector<1x2x8x96xf32>
    %142 = vector.shape_cast %141 : vector<1x2x8x96xf32> to vector<2x8x96xf32>
    %c1_134 = arith.constant 1 : index
    %c0_135 = arith.constant 0 : index
    %c0_136 = arith.constant 0 : index
    %c0_137 = arith.constant 0 : index
    %143 = vector.load %arg5[%c1_134, %c0_135, %c0_136, %c0_137] : memref<2x2x8x288xf32, #tpu.memory_space<vmem>>, vector<1x2x8x96xf32>
    %144 = vector.shape_cast %143 : vector<1x2x8x96xf32> to vector<2x8x96xf32>
    %145 = vector.shape_cast %142 : vector<2x8x96xf32> to vector<1x2x8x96xf32>
    tpu.vector_store %arg5[%c1_134, %c0_135, %c0_136, %c0_137], %145 {strides = array<i32>} : memref<2x2x8x288xf32, #tpu.memory_space<vmem>>, vector<1x2x8x96xf32>,
    %146 = vector.extract_strided_slice %121 {offsets = [1, 0, 0, 0], sizes = [1, 2, 8, 96], strides = [1, 1, 1, 1]} : vector<2x2x8x96xf32> to vector<1x2x8x96xf32>
    %147 = vector.shape_cast %146 : vector<1x2x8x96xf32> to vector<2x8x96xf32>
    %c1_138 = arith.constant 1 : index
    %c0_139 = arith.constant 0 : index
    %c0_140 = arith.constant 0 : index
    %c96_141 = arith.constant 96 : index
    %148 = vector.load %arg5[%c1_138, %c0_139, %c0_140, %c96_141] : memref<2x2x8x288xf32, #tpu.memory_space<vmem>>, vector<1x2x8x96xf32>
    %149 = vector.shape_cast %148 : vector<1x2x8x96xf32> to vector<2x8x96xf32>
    %150 = vector.shape_cast %147 : vector<2x8x96xf32> to vector<1x2x8x96xf32>
    tpu.vector_store %arg5[%c1_138, %c0_139, %c0_140, %c96_141], %150 {strides = array<i32>} : memref<2x2x8x288xf32, #tpu.memory_space<vmem>>, vector<1x2x8x96xf32>,
    %cst_142 = arith.constant 0.000000e+00 : f32
    %151 = vector.broadcast %cst_142 : f32 to vector<2x1x96xf32>
    %c1_143 = arith.constant 1 : index
    %c0_144 = arith.constant 0 : index
    %c7_145 = arith.constant 7 : index
    %c192_146 = arith.constant 192 : index
    %152 = vector.load %arg5[%c1_143, %c0_144, %c7_145, %c192_146] : memref<2x2x8x288xf32, #tpu.memory_space<vmem>>, vector<1x2x1x96xf32>
    %153 = vector.shape_cast %152 : vector<1x2x1x96xf32> to vector<2x1x96xf32>
    %154 = vector.shape_cast %151 : vector<2x1x96xf32> to vector<1x2x1x96xf32>
    tpu.vector_store %arg5[%c1_143, %c0_144, %c7_145, %c192_146], %154 {strides = array<i32>} : memref<2x2x8x288xf32, #tpu.memory_space<vmem>>, vector<1x2x1x96xf32>,
    %155 = vector.extract_strided_slice %121 {offsets = [0, 0, 1, 0], sizes = [1, 2, 7, 96], strides = [1, 1, 1, 1]} : vector<2x2x8x96xf32> to vector<1x2x7x96xf32>
    %156 = vector.shape_cast %155 : vector<1x2x7x96xf32> to vector<2x7x96xf32>
    %c1_147 = arith.constant 1 : index
    %c0_148 = arith.constant 0 : index
    %c0_149 = arith.constant 0 : index
    %c192_150 = arith.constant 192 : index
    %157 = vector.load %arg5[%c1_147, %c0_148, %c0_149, %c192_150] : memref<2x2x8x288xf32, #tpu.memory_space<vmem>>, vector<1x2x7x96xf32>
    %158 = vector.shape_cast %157 : vector<1x2x7x96xf32> to vector<2x7x96xf32>
    %159 = vector.shape_cast %156 : vector<2x7x96xf32> to vector<1x2x7x96xf32>
    tpu.vector_store %arg5[%c1_147, %c0_148, %c0_149, %c192_150], %159 {strides = array<i32>} : memref<2x2x8x288xf32, #tpu.memory_space<vmem>>, vector<1x2x7x96xf32>,
    %c0_151 = arith.constant 0 : index
    %c0_152 = arith.constant 0 : index
    %c0_153 = arith.constant 0 : index
    %c0_154 = arith.constant 0 : index
    %160 = vector.load %arg5[%c0_151, %c0_152, %c0_153, %c0_154] : memref<2x2x8x288xf32, #tpu.memory_space<vmem>>, vector<2x2x8x288xf32>
    %161 = vector.shape_cast %160 : vector<2x2x8x288xf32> to vector<32x288xf32>
    %c296 = arith.constant 296 : index
    %c0_155 = arith.constant 0 : index
    %162 = vector.load %arg2[%c296, %c0_155] : memref<2312x128xf32, #tpu.memory_space<vmem>>, vector<288x128xf32>
    %cst_156 = arith.constant dense<0.000000e+00> : vector<32x128xf32>
    %163 = tpu.matmul %161, %162, %cst_156 {dimension_numbers = #tpu.dot_dimension_numbers<[1], [0], [0], [1], [0, 0, 1, 1], [], []>} : vector<32x288xf32>, vector<288x128xf32>, vector<32x128xf32> -> vector<32x128xf32>
    %c584 = arith.constant 584 : index
    %c0_157 = arith.constant 0 : index
    %164 = vector.load %arg2[%c584, %c0_157] : memref<2312x128xf32, #tpu.memory_space<vmem>>, vector<288x128xf32>
    %cst_158 = arith.constant dense<0.000000e+00> : vector<32x128xf32>
    %165 = tpu.matmul %161, %164, %cst_158 {dimension_numbers = #tpu.dot_dimension_numbers<[1], [0], [0], [1], [0, 0, 1, 1], [], []>} : vector<32x288xf32>, vector<288x128xf32>, vector<32x128xf32> -> vector<32x128xf32>
    %cst_159 = arith.constant dense<0.000000e+00> : vector<128xf32>
    %166 = vector.multi_reduction <add>, %163, %cst_159 [0] : vector<32x128xf32> to vector<128xf32>
    %167 = vector.shape_cast %166 : vector<128xf32> to vector<1x128xf32>
    %cst_160 = arith.constant dense<0.000000e+00> : vector<128xf32>
    %168 = vector.multi_reduction <add>, %165, %cst_160 [0] : vector<32x128xf32> to vector<128xf32>
    %169 = vector.shape_cast %168 : vector<128xf32> to vector<1x128xf32>
    %170 = arith.addf %167, %169 : vector<1x128xf32>
    %171 = arith.mulf %163, %163 : vector<32x128xf32>
    %cst_161 = arith.constant dense<0.000000e+00> : vector<128xf32>
    %172 = vector.multi_reduction <add>, %171, %cst_161 [0] : vector<32x128xf32> to vector<128xf32>
    %173 = vector.shape_cast %172 : vector<128xf32> to vector<1x128xf32>
    %174 = arith.mulf %165, %165 : vector<32x128xf32>
    %cst_162 = arith.constant dense<0.000000e+00> : vector<128xf32>
    %175 = vector.multi_reduction <add>, %174, %cst_162 [0] : vector<32x128xf32> to vector<128xf32>
    %176 = vector.shape_cast %175 : vector<128xf32> to vector<1x128xf32>
    %177 = arith.addf %173, %176 : vector<1x128xf32>
    %178 = tpu.concatenate %170, %177 in 0 : vector<1x128xf32>, vector<1x128xf32> -> vector<2x128xf32>
    %c872 = arith.constant 872 : index
    %c0_163 = arith.constant 0 : index
    %179 = vector.load %arg2[%c872, %c0_163] : memref<2312x128xf32, #tpu.memory_space<vmem>>, vector<128x128xf32>
    %cst_164 = arith.constant dense<0.000000e+00> : vector<2x128xf32>
    %180 = tpu.matmul %178, %179, %cst_164 {dimension_numbers = #tpu.dot_dimension_numbers<[1], [0], [0], [1], [0, 0, 1, 1], [], []>} : vector<2x128xf32>, vector<128x128xf32>, vector<2x128xf32> -> vector<2x128xf32>
    %181 = vector.extract_strided_slice %180 {offsets = [0, 0], sizes = [1, 128], strides = [1, 1]} : vector<2x128xf32> to vector<1x128xf32>
    %cst_165 = arith.constant 5.120000e+02 : f32
    %182 = vector.broadcast %cst_165 : f32 to vector<1x128xf32>
    %183 = arith.divf %181, %182 : vector<1x128xf32>
    %184 = vector.extract_strided_slice %180 {offsets = [1, 0], sizes = [1, 128], strides = [1, 1]} : vector<2x128xf32> to vector<1x128xf32>
    %cst_166 = arith.constant 5.120000e+02 : f32
    %185 = vector.broadcast %cst_166 : f32 to vector<1x128xf32>
    %186 = arith.divf %184, %185 : vector<1x128xf32>
    %187 = arith.mulf %183, %183 : vector<1x128xf32>
    %188 = arith.subf %186, %187 : vector<1x128xf32>
    %c1000 = arith.constant 1000 : index
    %c0_167 = arith.constant 0 : index
    %189 = vector.load %arg2[%c1000, %c0_167] : memref<2312x128xf32, #tpu.memory_space<vmem>>, vector<2x128xf32>
    %cst_168 = arith.constant 9.99999974E-6 : f32
    %190 = vector.broadcast %cst_168 : f32 to vector<1x128xf32>
    %191 = arith.addf %188, %190 : vector<1x128xf32>
    %192 = math.rsqrt %191 : vector<1x128xf32>
    %193 = vector.extract_strided_slice %189 {offsets = [0, 0], sizes = [1, 128], strides = [1, 1]} : vector<2x128xf32> to vector<1x128xf32>
    %194 = arith.mulf %192, %193 : vector<1x128xf32>
    %195 = vector.extract_strided_slice %189 {offsets = [1, 0], sizes = [1, 128], strides = [1, 1]} : vector<2x128xf32> to vector<1x128xf32>
    %196 = arith.mulf %183, %194 : vector<1x128xf32>
    %197 = arith.subf %195, %196 : vector<1x128xf32>
    %198 = vector.broadcast %194 : vector<1x128xf32> to vector<32x128xf32>
    %199 = arith.mulf %163, %198 : vector<32x128xf32>
    %200 = vector.broadcast %197 : vector<1x128xf32> to vector<32x128xf32>
    %201 = arith.addf %199, %200 : vector<32x128xf32>
    %202 = vector.broadcast %194 : vector<1x128xf32> to vector<32x128xf32>
    %203 = arith.mulf %165, %202 : vector<32x128xf32>
    %204 = vector.broadcast %197 : vector<1x128xf32> to vector<32x128xf32>
    %205 = arith.addf %203, %204 : vector<32x128xf32>
    %206 = arith.maximumf %201, %205 : vector<32x128xf32>
    %207 = vector.shape_cast %206 : vector<32x128xf32> to vector<2x16x128xf32>
    %208 = vector.extract_strided_slice %207 {offsets = [0, 0, 0], sizes = [1, 16, 128], strides = [1, 1, 1]} : vector<2x16x128xf32> to vector<1x16x128xf32>
    %209 = vector.shape_cast %208 : vector<1x16x128xf32> to vector<16x128xf32>
    %210 = vector.extract_strided_slice %207 {offsets = [1, 0, 0], sizes = [1, 16, 128], strides = [1, 1, 1]} : vector<2x16x128xf32> to vector<1x16x128xf32>
    %211 = vector.shape_cast %210 : vector<1x16x128xf32> to vector<16x128xf32>
    %212 = arith.maximumf %209, %211 : vector<16x128xf32>
    %213 = vector.shape_cast %212 : vector<16x128xf32> to vector<2x8x128xf32>
    %214 = vector.extract_strided_slice %213 {offsets = [0, 0, 0], sizes = [2, 1, 128], strides = [1, 1, 1]} : vector<2x8x128xf32> to vector<2x1x128xf32>
    %215 = vector.shape_cast %214 : vector<2x1x128xf32> to vector<2x128xf32>
    %216 = vector.extract_strided_slice %213 {offsets = [0, 1, 0], sizes = [2, 1, 128], strides = [1, 1, 1]} : vector<2x8x128xf32> to vector<2x1x128xf32>
    %217 = vector.shape_cast %216 : vector<2x1x128xf32> to vector<2x128xf32>
    %218 = vector.extract_strided_slice %213 {offsets = [0, 2, 0], sizes = [2, 1, 128], strides = [1, 1, 1]} : vector<2x8x128xf32> to vector<2x1x128xf32>
    %219 = vector.shape_cast %218 : vector<2x1x128xf32> to vector<2x128xf32>
    %220 = vector.extract_strided_slice %213 {offsets = [0, 3, 0], sizes = [2, 1, 128], strides = [1, 1, 1]} : vector<2x8x128xf32> to vector<2x1x128xf32>
    %221 = vector.shape_cast %220 : vector<2x1x128xf32> to vector<2x128xf32>
    %222 = vector.extract_strided_slice %213 {offsets = [0, 4, 0], sizes = [2, 1, 128], strides = [1, 1, 1]} : vector<2x8x128xf32> to vector<2x1x128xf32>
    %223 = vector.shape_cast %222 : vector<2x1x128xf32> to vector<2x128xf32>
    %224 = vector.extract_strided_slice %213 {offsets = [0, 5, 0], sizes = [2, 1, 128], strides = [1, 1, 1]} : vector<2x8x128xf32> to vector<2x1x128xf32>
    %225 = vector.shape_cast %224 : vector<2x1x128xf32> to vector<2x128xf32>
    %226 = vector.extract_strided_slice %213 {offsets = [0, 6, 0], sizes = [2, 1, 128], strides = [1, 1, 1]} : vector<2x8x128xf32> to vector<2x1x128xf32>
    %227 = vector.shape_cast %226 : vector<2x1x128xf32> to vector<2x128xf32>
    %228 = vector.extract_strided_slice %213 {offsets = [0, 7, 0], sizes = [2, 1, 128], strides = [1, 1, 1]} : vector<2x8x128xf32> to vector<2x1x128xf32>
    %229 = vector.shape_cast %228 : vector<2x1x128xf32> to vector<2x128xf32>
    %230 = tpu.concatenate %215, %217, %219, %221, %223, %225, %227, %229 in 1 : vector<2x128xf32>, vector<2x128xf32>, vector<2x128xf32>, vector<2x128xf32>, vector<2x128xf32>, vector<2x128xf32>, vector<2x128xf32>, vector<2x128xf32> -> vector<2x1024xf32>
    %c1008 = arith.constant 1008 : index
    %c0_169 = arith.constant 0 : index
    %231 = vector.load %arg2[%c1008, %c0_169] : memref<2312x128xf32, #tpu.memory_space<vmem>>, vector<1024x128xf32>
    %cst_170 = arith.constant dense<0.000000e+00> : vector<2x128xf32>
    %232 = tpu.matmul %230, %231, %cst_170 {dimension_numbers = #tpu.dot_dimension_numbers<[1], [0], [0], [1], [0, 0, 1, 1], [], []>} : vector<2x1024xf32>, vector<1024x128xf32>, vector<2x128xf32> -> vector<2x128xf32>
    %c2032 = arith.constant 2032 : index
    %c0_171 = arith.constant 0 : index
    %233 = vector.load %arg2[%c2032, %c0_171] : memref<2312x128xf32, #tpu.memory_space<vmem>>, vector<1x128xf32>
    %234 = vector.broadcast %233 : vector<1x128xf32> to vector<2x128xf32>
    %235 = arith.addf %232, %234 : vector<2x128xf32>
    %cst_172 = arith.constant 0.000000e+00 : f32
    %236 = vector.broadcast %cst_172 : f32 to vector<2x128xf32>
    %237 = arith.maximumf %235, %236 : vector<2x128xf32>
    %c2040 = arith.constant 2040 : index
    %c0_173 = arith.constant 0 : index
    %238 = vector.load %arg2[%c2040, %c0_173] : memref<2312x128xf32, #tpu.memory_space<vmem>>, vector<128x128xf32>
    %cst_174 = arith.constant dense<0.000000e+00> : vector<2x128xf32>
    %239 = tpu.matmul %237, %238, %cst_174 {dimension_numbers = #tpu.dot_dimension_numbers<[1], [0], [0], [1], [0, 0, 1, 1], [], []>} : vector<2x128xf32>, vector<128x128xf32>, vector<2x128xf32> -> vector<2x128xf32>
    %c2168 = arith.constant 2168 : index
    %c0_175 = arith.constant 0 : index
    %240 = vector.load %arg2[%c2168, %c0_175] : memref<2312x128xf32, #tpu.memory_space<vmem>>, vector<1x128xf32>
    %241 = vector.broadcast %240 : vector<1x128xf32> to vector<2x128xf32>
    %242 = arith.addf %239, %241 : vector<2x128xf32>
    %cst_176 = arith.constant 0.000000e+00 : f32
    %243 = vector.broadcast %cst_176 : f32 to vector<2x128xf32>
    %244 = arith.maximumf %242, %243 : vector<2x128xf32>
    %c2176 = arith.constant 2176 : index
    %c0_177 = arith.constant 0 : index
    %245 = vector.load %arg2[%c2176, %c0_177] : memref<2312x128xf32, #tpu.memory_space<vmem>>, vector<128x128xf32>
    %cst_178 = arith.constant dense<0.000000e+00> : vector<2x128xf32>
    %246 = tpu.matmul %244, %245, %cst_178 {dimension_numbers = #tpu.dot_dimension_numbers<[1], [0], [0], [1], [0, 0, 1, 1], [], []>} : vector<2x128xf32>, vector<128x128xf32>, vector<2x128xf32> -> vector<2x128xf32>
    %c2304 = arith.constant 2304 : index
    %c0_179 = arith.constant 0 : index
    %247 = vector.load %arg2[%c2304, %c0_179] : memref<2312x128xf32, #tpu.memory_space<vmem>>, vector<1x128xf32>
    %248 = vector.broadcast %247 : vector<1x128xf32> to vector<2x128xf32>
    %249 = arith.addf %246, %248 : vector<2x128xf32>
    %250 = vector.extract_strided_slice %249 {offsets = [0, 0], sizes = [2, 10], strides = [1, 1]} : vector<2x128xf32> to vector<2x10xf32>
    %c0_180 = arith.constant 0 : index
    %c0_181 = arith.constant 0 : index
    %251 = vector.load %arg3[%c0_180, %c0_181] : memref<2x10xf32, #tpu.memory_space<vmem>>, vector<2x10xf32>
    tpu.vector_store %arg3[%c0_180, %c0_181], %250 {strides = array<i32>} : memref<2x10xf32, #tpu.memory_space<vmem>>, vector<2x10xf32>,
    return
  }
  func.func @transform_0(%arg0: i32) -> (i32, i32, i32, i32) {
    %c0_i32 = arith.constant 0 : i32
    %c0_i32_0 = arith.constant 0 : i32
    %c0_i32_1 = arith.constant 0 : i32
    %c0_i32_2 = arith.constant 0 : i32
    %c0_i32_3 = arith.constant 0 : i32
    return %c0_i32, %c0_i32_0, %c0_i32_1, %c0_i32_2 : i32, i32, i32, i32
  }
  func.func @transform_1(%arg0: i32) -> (i32, i32) {
    %c0_i32 = arith.constant 0 : i32
    %c0_i32_0 = arith.constant 0 : i32
    %c0_i32_1 = arith.constant 0 : i32
    return %c0_i32, %c0_i32_0 : i32, i32
  }
  func.func @transform_2(%arg0: i32) -> (i32, i32) {
    %c0_i32 = arith.constant 0 : i32
    %c0_i32_0 = arith.constant 0 : i32
    %c0_i32_1 = arith.constant 0 : i32
    return %c0_i32, %c0_i32_0 : i32, i32
  }
}

</mosaic_0001>

<llo_original>
// kernel: tile.23
$region0: #{tile.23}
  #allocation0 [shape = 's32[1]{0}', space=sflag, size = 0x4, scoped, tag = 'scoped memory for tile.23']
  %s0 = inlined_call_operand.vmem [shape: f32[6], index: 0, kind: input, shape index: {}]
  %s1 = inlined_call_operand.vmem [shape: f32[16,6], index: 1, kind: output, shape index: {}]
  // Predicated region
  $region2: #{tile.23} parent=0 // pred_check
    _
  $region3: #{tile.23} parent=0 // pred_check_branch
    %3 = sbr.rel (0) target = $region5
  $region4: #{tile.23} parent=0 // pred_region
    _
  $region5: #{tile.23} parent=0 // pred_fallthru
    _
  %v4 = vld [vmem:[%s0] ss:$0 sm:$0xff]
  %5 = vst [vmem:[%s1] sm:$0xff] %v4
  %s6 = scalar_lea.vmem %s1, 8
  %7 = vst [vmem:[%s6] sm:$0xff] %v4

// kernel: tile.28
$region0: #{tile.28}
  %s0 = inlined_call_operand.vmem [shape: f32[16,6], index: 0, kind: input, shape index: {}]
  %s1 = inlined_call_operand.vmem [shape: f32[1,96], index: 1, kind: output, shape index: {}]
  $region1: #{tile.28} parent=0
    #allocation0 [shape = 'u8[4096]{0}', space=vmem, size = 0x1000, scoped, tag = 'scoped mem for output reshape']
    %v2 = vld [vmem:[%s0] sm:$0x1]
    %vm3 = vcmask 48128
    %4 = vst.msk [vmem:[#allocation0] sm:$0x1] %vm3, %v2
    %s5 = scalar_lea.vmem %s0, 15
    %v6 = vld [vmem:[%s5] sm:$0x1]
    %7 = vrot.lane.b32.xlu0 %v6, 90
    %v8 = vpop.permute.xlu0 %7
    %vm9 = vcmask 786128
    %10 = vst.msk [vmem:[#allocation0] sm:$0x1] %vm9, %v8
    %s11 = scalar_lea.vmem %s0, 14
    %v12 = vld [vmem:[%s11] sm:$0x1]
    %13 = vrot.lane.b32.xlu0 %v12, 84
    %v14 = vpop.permute.xlu0 %13
    %vm15 = vcmask 736928
    %16 = vst.msk [vmem:[#allocation0] sm:$0x1] %vm15, %v14
    %s17 = scalar_lea.vmem %s0, 13
    %v18 = vld [vmem:[%s17] sm:$0x1]
    %19 = vrot.lane.b32.xlu0 %v18, 78
    %v20 = vpop.permute.xlu0 %19
    %vm21 = vcmask 687728
    %22 = vst.msk [vmem:[#allocation0] sm:$0x1] %vm21, %v20
    %s23 = scalar_lea.vmem %s0, 12
    %v24 = vld [vmem:[%s23] sm:$0x1]
    %25 = vrot.lane.b32.xlu0 %v24, 72
    %v26 = vpop.permute.xlu0 %25
    %vm27 = vcmask 638528
    %28 = vst.msk [vmem:[#allocation0] sm:$0x1] %vm27, %v26
    %s29 = scalar_lea.vmem %s0, 11
    %v30 = vld [vmem:[%s29] sm:$0x1]
    %31 = vrot.lane.b32.xlu0 %v30, 66
    %v32 = vpop.permute.xlu0 %31
    %vm33 = vcmask 589328
    %34 = vst.msk [vmem:[#allocation0] sm:$0x1] %vm33, %v32
    %s35 = scalar_lea.vmem %s0, 10
    %v36 = vld [vmem:[%s35] sm:$0x1]
    %37 = vrot.lane.b32.xlu0 %v36, 60
    %v38 = vpop.permute.xlu0 %37
    %vm39 = vcmask 540128
    %40 = vst.msk [vmem:[#allocation0] sm:$0x1] %vm39, %v38
    %s41 = scalar_lea.vmem %s0, 9
    %v42 = vld [vmem:[%s41] sm:$0x1]
    %43 = vrot.lane.b32.xlu0 %v42, 54
    %v44 = vpop.permute.xlu0 %43
    %vm45 = vcmask 490928
    %46 = vst.msk [vmem:[#allocation0] sm:$0x1] %vm45, %v44
    %s47 = scalar_lea.vmem %s0, 8
    %v48 = vld [vmem:[%s47] sm:$0x1]
    %49 = vrot.lane.b32.xlu0 %v48, 48
    %v50 = vpop.permute.xlu0 %49
    %vm51 = vcmask 441728
    %52 = vst.msk [vmem:[#allocation0] sm:$0x1] %vm51, %v50
    %s53 = scalar_lea.vmem %s0, 7
    %v54 = vld [vmem:[%s53] sm:$0x1]
    %55 = vrot.lane.b32.xlu0 %v54, 42
    %v56 = vpop.permute.xlu0 %55
    %vm57 = vcmask 392528
    %58 = vst.msk [vmem:[#allocation0] sm:$0x1] %vm57, %v56
    %s59 = scalar_lea.vmem %s0, 6
    %v60 = vld [vmem:[%s59] sm:$0x1]
    %61 = vrot.lane.b32.xlu0 %v60, 36
    %v62 = vpop.permute.xlu0 %61
    %vm63 = vcmask 343328
    %64 = vst.msk [vmem:[#allocation0] sm:$0x1] %vm63, %v62
    %s65 = scalar_lea.vmem %s0, 5
    %v66 = vld [vmem:[%s65] sm:$0x1]
    %67 = vrot.lane.b32.xlu0 %v66, 30
    %v68 = vpop.permute.xlu0 %67
    %vm69 = vcmask 294128
    %70 = vst.msk [vmem:[#allocation0] sm:$0x1] %vm69, %v68
    %s71 = scalar_lea.vmem %s0, 4
    %v72 = vld [vmem:[%s71] sm:$0x1]
    %73 = vrot.lane.b32.xlu0 %v72, 24
    %v74 = vpop.permute.xlu0 %73
    %vm75 = vcmask 244928
    %76 = vst.msk [vmem:[#allocation0] sm:$0x1] %vm75, %v74
    %s77 = scalar_lea.vmem %s0, 3
    %v78 = vld [vmem:[%s77] sm:$0x1]
    %79 = vrot.lane.b32.xlu0 %v78, 18
    %v80 = vpop.permute.xlu0 %79
    %vm81 = vcmask 195728
    %82 = vst.msk [vmem:[#allocation0] sm:$0x1] %vm81, %v80
    %s83 = scalar_lea.vmem %s0, 2
    %v84 = vld [vmem:[%s83] sm:$0x1]
    %85 = vrot.lane.b32.xlu0 %v84, 12
    %v86 = vpop.permute.xlu0 %85
    %vm87 = vcmask 146528
    %88 = vst.msk [vmem:[#allocation0] sm:$0x1] %vm87, %v86
    %s89 = scalar_lea.vmem %s0, 1
    %v90 = vld [vmem:[%s89] sm:$0x1]
    %91 = vrot.lane.b32.xlu0 %v90, 6
    %v92 = vpop.permute.xlu0 %91
    %vm93 = vcmask 97328
    %94 = vst.msk [vmem:[#allocation0] sm:$0x1] %vm93, %v92
    %s96 = sshll.u32 1, 1
    %s97 = ssub.s32 %s96, 1
    %v99 = vld [vmem:[#allocation0] sm:%s97]
    %s100 = sshll.u32 1, 1
    %s101 = ssub.s32 %s100, 1
    %102 = vst [vmem:[%s1] sm:%s101] %v99

// kernel: tile.33
$region0: #{tile.33}
  #allocation0 [shape = 's32[1]{0}', space=sflag, size = 0x4, scoped, tag = 'scoped memory for tile.33']
  %s0 = inlined_call_operand.vmem [shape: f32[16], index: 0, kind: input, shape index: {}]
  %s1 = inlined_call_operand.vmem [shape: f32[8,16], index: 1, kind: output, shape index: {}]
  // Predicated region
  $region2: #{tile.33} parent=0 // pred_check
    _
  $region3: #{tile.33} parent=0 // pred_check_branch
    %3 = sbr.rel (0) target = $region5
  $region4: #{tile.33} parent=0 // pred_region
    _
  $region5: #{tile.33} parent=0 // pred_fallthru
    _
  %v4 = vld [vmem:[%s0] ss:$0 sm:$0xff]
  %5 = vst [vmem:[%s1] sm:$0xff] %v4

// kernel: tile.38
$region0: #{tile.38}
  %s0 = inlined_call_operand.vmem [shape: f32[8,16], index: 0, kind: input, shape index: {}]
  %s1 = inlined_call_operand.vmem [shape: f32[1,128], index: 1, kind: output, shape index: {}]
  $region1: #{tile.38} parent=0
    #allocation0 [shape = 'u8[4096]{0}', space=vmem, size = 0x1000, scoped, tag = 'scoped mem for output reshape']
    %v2 = vld [vmem:[%s0] sm:$0x1]
    %vm3 = vcmask 130048
    %4 = vst.msk [vmem:[#allocation0] sm:$0x1] %vm3, %v2
    %s5 = scalar_lea.vmem %s0, 7
    %v6 = vld [vmem:[%s5] sm:$0x1]
    %7 = vrot.lane.b32.xlu0 %v6, 112
    %v8 = vpop.permute.xlu0 %7
    %vm9 = vcmask 1048448
    %10 = vst.msk [vmem:[#allocation0] sm:$0x1] %vm9, %v8
    %s11 = scalar_lea.vmem %s0, 6
    %v12 = vld [vmem:[%s11] sm:$0x1]
    %13 = vrot.lane.b32.xlu0 %v12, 96
    %v14 = vpop.permute.xlu0 %13
    %vm15 = vcmask 917248
    %16 = vst.msk [vmem:[#allocation0] sm:$0x1] %vm15, %v14
    %s17 = scalar_lea.vmem %s0, 5
    %v18 = vld [vmem:[%s17] sm:$0x1]
    %19 = vrot.lane.b32.xlu0 %v18, 80
    %v20 = vpop.permute.xlu0 %19
    %vm21 = vcmask 786048
    %22 = vst.msk [vmem:[#allocation0] sm:$0x1] %vm21, %v20
    %s23 = scalar_lea.vmem %s0, 4
    %v24 = vld [vmem:[%s23] sm:$0x1]
    %25 = vrot.lane.b32.xlu0 %v24, 64
    %v26 = vpop.permute.xlu0 %25
    %vm27 = vcmask 654848
    %28 = vst.msk [vmem:[#allocation0] sm:$0x1] %vm27, %v26
    %s29 = scalar_lea.vmem %s0, 3
    %v30 = vld [vmem:[%s29] sm:$0x1]
    %31 = vrot.lane.b32.xlu0 %v30, 48
    %v32 = vpop.permute.xlu0 %31
    %vm33 = vcmask 523648
    %34 = vst.msk [vmem:[#allocation0] sm:$0x1] %vm33, %v32
    %s35 = scalar_lea.vmem %s0, 2
    %v36 = vld [vmem:[%s35] sm:$0x1]
    %37 = vrot.lane.b32.xlu0 %v36, 32
    %v38 = vpop.permute.xlu0 %37
    %vm39 = vcmask 392448
    %40 = vst.msk [vmem:[#allocation0] sm:$0x1] %vm39, %v38
    %s41 = scalar_lea.vmem %s0, 1
    %v42 = vld [vmem:[%s41] sm:$0x1]
    %43 = vrot.lane.b32.xlu0 %v42, 16
    %v44 = vpop.permute.xlu0 %43
    %vm45 = vcmask 261248
    %46 = vst.msk [vmem:[#allocation0] sm:$0x1] %vm45, %v44
    %s48 = sshll.u32 1, 1
    %s49 = ssub.s32 %s48, 1
    %v51 = vld [vmem:[#allocation0] sm:%s49]
    %s52 = sshll.u32 1, 1
    %s53 = ssub.s32 %s52, 1
    %54 = vst [vmem:[%s1] sm:%s53] %v51

// kernel: lenet_forward.1
$region0: #{lenet_forward.1}
  #allocation0 [shape = 'u32[]', space=smem, size = 0x4, offset = 0x4, fixed_abs, tag = 'smem constant byte address 0x4 - core index']
  #allocation1 [shape = 'u32[144,128]{1,0:T(1,128)}', space=vmem, size = 0x12000, scoped, tag = 'internal scratch']
  #allocation2 [shape = 'f32[4,2,8,96]{3,2,1,0:T(8,128)}', space=vmem, size = 0x8000, scoped, tag = 'scratch operand']
  #allocation3 [shape = 'f32[2,2,8,288]{3,2,1,0:T(8,128)}', space=vmem, size = 0xc000, scoped, tag = 'scratch operand']
  %s0 = inlined_call_operand.vmem [shape: f32[4,2,8,32], index: 0, kind: input, shape index: {}]
  %s1 = inlined_call_operand.vmem [shape: f32[2312,128], index: 1, kind: input, shape index: {}]
  %s2 = inlined_call_operand.hbm [shape: f32[2,10], index: 2, kind: output, shape index: {}]
  %s3 = sld [smem:[#allocation0]]
  $region18: #{lenet_forward.1} parent=0
    _
  %s5 = ssub.s32 1, %s3
  %s6 = scalar_select 0, %s5, %s3
  $region1: #{lenet_forward.1} parent=0
    #allocation4 [shape = 'u8[1024]{0}', space=vmem, size = 0x400, scoped, tag = 'output window, operand 0, single buffered']
    #allocation5 [shape = 's32[1]{0}', space=sflag, size = 0x4, scoped, tag = 'scoped memory for lenet_forward.1']
    %7 = vsyncpa [#allocation5], 0
    // Predicated region
    $region2: #{lenet_forward.1} parent=1 // pred_check
      _
    $region3: #{lenet_forward.1} parent=1 // pred_check_branch
      %9 = sbr.rel (0) target = $region5
    $region4: #{lenet_forward.1} parent=1 // pred_region
      _
    $region5: #{lenet_forward.1} parent=1 // pred_fallthru
      _
    // Predicated region
    $region6: #{lenet_forward.1} parent=1 // pred_check
      _
    $region7: #{lenet_forward.1} parent=1 // pred_check_branch
      %11 = sbr.rel (0) target = $region9
    $region8: #{lenet_forward.1} parent=1 // pred_region
      _
    $region9: #{lenet_forward.1} parent=1 // pred_fallthru
      _
    %vm12 = vcmask 253952
    %13 = vst.msk [vmem:[#allocation2] sm:$0x1] %vm12, 0.0
    %14 = vst.msk [vmem:[#allocation2 + $0x8] sm:$0x1] %vm12, 0.0
    %s15 = scalar_lea.vmem %s0, 48
    %v16 = vld [vmem:[%s15] sm:$0x7f]
    %v17 = vld [vmem:[%s15 + $0x8] sm:$0x7f]
    %vm18 = vcmask 260096
    %19 = vst.msk [vmem:[#allocation2 + $0x1] sm:$0x7f] %vm18, %v16
    %20 = vst.msk [vmem:[#allocation2 + $0x9] sm:$0x7f] %vm18, %v17
    %v21 = vld [vmem:[%s0] sm:$0xff]
    %v22 = vld [vmem:[%s0 + $0x8] sm:$0xff]
    %25 = vrot.lane.b32.xlu0 %v21, 32
    %v26 = vpop.permute.xlu0 %25
    %27 = vrot.lane.b32.xlu0 %v22, 32
    %v28 = vpop.permute.xlu0 %27
    %vm31 = vcmask 523520
    %32 = vst.msk [vmem:[#allocation2] sm:$0xff] %vm31, %v26
    %33 = vst.msk [vmem:[#allocation2 + $0x8] sm:$0xff] %vm31, %v28
    %s34 = scalar_lea.vmem %s0, 16
    %v35 = vld [vmem:[%s34] sm:$0xff]
    %v36 = vld [vmem:[%s34 + $0x8] sm:$0xff]
    %39 = vrot.lane.b32.xlu0 %v35, 64
    %v40 = vpop.permute.xlu0 %39
    %41 = vrot.lane.b32.xlu0 %v36, 64
    %v42 = vpop.permute.xlu0 %41
    %vm45 = vcmask 785920
    %46 = vst.msk [vmem:[#allocation2] sm:$0xff] %vm45, %v40
    %47 = vst.msk [vmem:[#allocation2 + $0x8] sm:$0xff] %vm45, %v42
    %v48 = vld [vmem:[%s34] sm:$0xff]
    %v49 = vld [vmem:[%s34 + $0x8] sm:$0xff]
    %s50 = scalar_lea.vmem [#allocation2], 16
    %vm51 = vcmask 261120
    %52 = vst.msk [vmem:[%s50] sm:$0xff] %vm51, %v48
    %53 = vst.msk [vmem:[%s50 + $0x8] sm:$0xff] %vm51, %v49
    %s54 = scalar_lea.vmem %s0, 32
    %v55 = vld [vmem:[%s54] sm:$0xff]
    %v56 = vld [vmem:[%s54 + $0x8] sm:$0xff]
    %59 = vrot.lane.b32.xlu0 %v55, 32
    %v60 = vpop.permute.xlu0 %59
    %61 = vrot.lane.b32.xlu0 %v56, 32
    %v62 = vpop.permute.xlu0 %61
    %65 = vst.msk [vmem:[%s50] sm:$0xff] %vm31, %v60
    %66 = vst.msk [vmem:[%s50 + $0x8] sm:$0xff] %vm31, %v62
    %v67 = vld [vmem:[%s15] sm:$0xff]
    %v68 = vld [vmem:[%s15 + $0x8] sm:$0xff]
    %71 = vrot.lane.b32.xlu0 %v67, 64
    %v72 = vpop.permute.xlu0 %71
    %73 = vrot.lane.b32.xlu0 %v68, 64
    %v74 = vpop.permute.xlu0 %73
    %77 = vst.msk [vmem:[%s50] sm:$0xff] %vm45, %v72
    %78 = vst.msk [vmem:[%s50 + $0x8] sm:$0xff] %vm45, %v74
    %v79 = vld [vmem:[%s0] sm:$0xff]
    %v80 = vld [vmem:[%s0 + $0x8] sm:$0xff]
    %s81 = scalar_lea.vmem [#allocation2], 32
    %82 = vst.msk [vmem:[%s81] sm:$0xff] %vm51, %v79
    %83 = vst.msk [vmem:[%s81 + $0x8] sm:$0xff] %vm51, %v80
    %v84 = vld [vmem:[%s34] sm:$0xff]
    %v85 = vld [vmem:[%s34 + $0x8] sm:$0xff]
    %88 = vrot.lane.b32.xlu0 %v84, 32
    %v89 = vpop.permute.xlu0 %88
    %90 = vrot.lane.b32.xlu0 %v85, 32
    %v91 = vpop.permute.xlu0 %90
    %94 = vst.msk [vmem:[%s81] sm:$0xff] %vm31, %v89
    %95 = vst.msk [vmem:[%s81 + $0x8] sm:$0xff] %vm31, %v91
    %v96 = vld [vmem:[%s54] sm:$0xff]
    %v97 = vld [vmem:[%s54 + $0x8] sm:$0xff]
    %100 = vrot.lane.b32.xlu0 %v96, 64
    %v101 = vpop.permute.xlu0 %100
    %102 = vrot.lane.b32.xlu0 %v97, 64
    %v103 = vpop.permute.xlu0 %102
    %106 = vst.msk [vmem:[%s81] sm:$0xff] %vm45, %v101
    %107 = vst.msk [vmem:[%s81 + $0x8] sm:$0xff] %vm45, %v103
    %v108 = vld [vmem:[%s54] sm:$0xff]
    %v109 = vld [vmem:[%s54 + $0x8] sm:$0xff]
    %s110 = scalar_lea.vmem [#allocation2], 48
    %111 = vst.msk [vmem:[%s110] sm:$0xff] %vm51, %v108
    %112 = vst.msk [vmem:[%s110 + $0x8] sm:$0xff] %vm51, %v109
    %v113 = vld [vmem:[%s15] sm:$0xff]
    %v114 = vld [vmem:[%s15 + $0x8] sm:$0xff]
    %117 = vrot.lane.b32.xlu0 %v113, 32
    %v118 = vpop.permute.xlu0 %117
    %119 = vrot.lane.b32.xlu0 %v114, 32
    %v120 = vpop.permute.xlu0 %119
    %123 = vst.msk [vmem:[%s110] sm:$0xff] %vm31, %v118
    %124 = vst.msk [vmem:[%s110 + $0x8] sm:$0xff] %vm31, %v120
    %vm125 = vcmask 778752
    %126 = vst.msk [vmem:[%s110 + $0x7] sm:$0x1] %vm125, 0.0
    %127 = vst.msk [vmem:[%s110 + $0xf] sm:$0x1] %vm125, 0.0
    %v128 = vld [vmem:[%s0 + $0x1] sm:$0x7f]
    %v129 = vld [vmem:[%s0 + $0x9] sm:$0x7f]
    %132 = vrot.lane.b32.xlu0 %v128, 64
    %v133 = vpop.permute.xlu0 %132
    %134 = vrot.lane.b32.xlu0 %v129, 64
    %v135 = vpop.permute.xlu0 %134
    %vm138 = vcmask 784896
    %139 = vst.msk [vmem:[%s110] sm:$0x7f] %vm138, %v133
    %140 = vst.msk [vmem:[%s110 + $0x8] sm:$0x7f] %vm138, %v135
    %v141 = vld [vmem:[#allocation2] sm:$0xff]
    %v142 = vld [vmem:[#allocation2 + $0x8] sm:$0xff]
    %v143 = vld [vmem:[#allocation2 + $0x10] sm:$0xff]
    %v144 = vld [vmem:[#allocation2 + $0x18] sm:$0xff]
    %v145 = vld [vmem:[#allocation2 + $0x20] sm:$0xff]
    %v146 = vld [vmem:[#allocation2 + $0x28] sm:$0xff]
    %v147 = vld [vmem:[#allocation2 + $0x30] sm:$0xff]
    %v148 = vld [vmem:[#allocation2 + $0x38] sm:$0xff]
    %v149 = vld [vmem:[%s1] sm:$0xff]
    %v150 = vld [vmem:[%s1 + $0x8] sm:$0xff]
    %v151 = vld [vmem:[%s1 + $0x10] sm:$0xff]
    %v152 = vld [vmem:[%s1 + $0x18] sm:$0xff]
    %v153 = vld [vmem:[%s1 + $0x20] sm:$0xff]
    %v154 = vld [vmem:[%s1 + $0x28] sm:$0xff]
    %v155 = vld [vmem:[%s1 + $0x30] sm:$0xff]
    %v156 = vld [vmem:[%s1 + $0x38] sm:$0xff]
    %v157 = vld [vmem:[%s1 + $0x40] sm:$0xff]
    %v158 = vld [vmem:[%s1 + $0x48] sm:$0xff]
    %v159 = vld [vmem:[%s1 + $0x50] sm:$0xff]
    %v160 = vld [vmem:[%s1 + $0x58] sm:$0xff]
    %vm161 = vcmask 785408
    %v163 = vsel %vm161, %v141, 0
    %v166 = vsel %vm161, %v142, 0
    %v169 = vsel %vm161, %v143, 0
    %v172 = vsel %vm161, %v144, 0
    %v175 = vsel %vm161, %v145, 0
    %v178 = vsel %vm161, %v146, 0
    %v181 = vsel %vm161, %v147, 0
    %v184 = vsel %vm161, %v148, 0
    %186 = vmatprep.subr.mxu0 0.0
    %187 = vmatpush1.msra.mxu0 0.0
    %188 = vmatprep.subr.mxu0 0.0
    %189 = vmatpush1.msra.mxu0 0.0
    %190 = vmatprep.subr.mxu0 0.0
    %191 = vmatpush1.msra.mxu0 0.0
    %192 = vmatprep.subr.mxu0 0.0
    %193 = vmatpush1.msra.mxu0 0.0
    %194 = vmatprep.subr.mxu0 0.0
    %195 = vmatpush1.msra.mxu0 %v160
    %196 = vmatprep.subr.mxu0 0.0
    %197 = vmatpush1.msra.mxu0 %v159
    %198 = vmatprep.subr.mxu0 0.0
    %199 = vmatpush1.msra.mxu0 %v158
    %200 = vmatprep.subr.mxu0 0.0
    %201 = vmatpush1.msra.mxu0 %v157
    %202 = vmatprep.subr.mxu0 0.0
    %203 = vmatpush1.msra.mxu0 %v156
    %204 = vmatprep.subr.mxu0 0.0
    %205 = vmatpush1.msra.mxu0 %v155
    %206 = vmatprep.subr.mxu0 0.0
    %207 = vmatpush1.msra.mxu0 %v154
    %208 = vmatprep.subr.mxu0 0.0
    %209 = vmatpush1.msra.mxu0 %v153
    %210 = vmatprep.subr.mxu0 0.0
    %211 = vmatpush1.msra.mxu0 %v152
    %212 = vmatprep.subr.mxu0 0.0
    %213 = vmatpush1.msra.mxu0 %v151
    %214 = vmatprep.subr.mxu0 0.0
    %215 = vmatpush1.msra.mxu0 %v150
    %216 = vmatprep.subr.mxu0 0.0
    %217 = vmatpush1.msra.mxu0 %v149
    %218 = vmatprep.subr.mxu0 0.0
    %219 = vmatpush2.msra.mxu0 0.0
    %220 = vmatprep.subr.mxu0 0.0
    %221 = vmatpush2.msra.mxu0 0.0
    %222 = vmatprep.subr.mxu0 0.0
    %223 = vmatpush2.msra.mxu0 0.0
    %224 = vmatprep.subr.mxu0 0.0
    %225 = vmatpush2.msra.mxu0 0.0
    %226 = vmatprep.subr.mxu0 0.0
    %227 = vmatpush2.msra.mxu0 0.0
    %228 = vmatprep.subr.mxu0 0.0
    %229 = vmatpush2.msra.mxu0 0.0
    %230 = vmatprep.subr.mxu0 0.0
    %231 = vmatpush2.msra.mxu0 0.0
    %232 = vmatprep.subr.mxu0 0.0
    %233 = vmatpush2.msra.mxu0 0.0
    %234 = vmatprep.subr.mxu0 0.0
    %235 = vmatpush2.msra.mxu0 0.0
    %236 = vmatprep.subr.mxu0 0.0
    %237 = vmatpush2.msra.mxu0 0.0
    %238 = vmatprep.subr.mxu0 0.0
    %239 = vmatpush2.msra.mxu0 0.0
    %240 = vmatprep.subr.mxu0 0.0
    %241 = vmatpush2.msra.mxu0 0.0
    %242 = vmatprep.subr.mxu0 0.0
    %243 = vmatpush2.msra.mxu0 0.0
    %244 = vmatprep.subr.mxu0 0.0
    %245 = vmatpush2.msra.mxu0 0.0
    %246 = vmatprep.subr.mxu0 0.0
    %247 = vmatpush2.msra.mxu0 0.0
    %248 = vmatprep.subr.mxu0 0.0
    %249 = vmatpush2.msra.mxu0 0.0
    %250 = vmatprep.mubr.f32.mxu0 0.0
    %251 = vmatmul.mubr.f32.gmra.mxu0 %v163
    %v252 = vpop.f32.mrf.mxu0
    %v253 = vadd.f32 0.0, %v252
    %v254 = vpop.f32.mrf.mxu0
    %255 = vmatprep.mubr.f32.mxu0 0.0
    %256 = vmatmul.mubr.f32.gmra.mxu0 %v166
    %v257 = vpop.f32.mrf.mxu0
    %v258 = vadd.f32 0.0, %v257
    %v259 = vpop.f32.mrf.mxu0
    %260 = vmatprep.mubr.f32.mxu0 0.0
    %261 = vmatmul.mubr.f32.gmra.mxu0 %v169
    %v262 = vpop.f32.mrf.mxu0
    %v263 = vadd.f32 0.0, %v262
    %v264 = vpop.f32.mrf.mxu0
    %265 = vmatprep.mubr.f32.mxu0 0.0
    %266 = vmatmul.mubr.f32.gmra.mxu0 %v172
    %v267 = vpop.f32.mrf.mxu0
    %v268 = vadd.f32 0.0, %v267
    %v269 = vpop.f32.mrf.mxu0
    %270 = vmatprep.mubr.f32.mxu0 0.0
    %271 = vmatmul.mubr.f32.gmra.mxu0 %v175
    %v272 = vpop.f32.mrf.mxu0
    %v273 = vadd.f32 0.0, %v272
    %v274 = vpop.f32.mrf.mxu0
    %275 = vmatprep.mubr.f32.mxu0 0.0
    %276 = vmatmul.mubr.f32.gmra.mxu0 %v178
    %v277 = vpop.f32.mrf.mxu0
    %v278 = vadd.f32 0.0, %v277
    %v279 = vpop.f32.mrf.mxu0
    %280 = vmatprep.mubr.f32.mxu0 0.0
    %281 = vmatmul.mubr.f32.gmra.mxu0 %v181
    %v282 = vpop.f32.mrf.mxu0
    %v283 = vadd.f32 0.0, %v282
    %v284 = vpop.f32.mrf.mxu0
    %285 = vmatprep.mubr.f32.mxu0 0.0
    %286 = vmatmul.mubr.f32.gmra.mxu0 %v184
    %v287 = vpop.f32.mrf.mxu0
    %v288 = vadd.f32 0.0, %v287
    %v289 = vpop.f32.mrf.mxu0
    %290 = vdwg.mxu0
    %v291 = vld [vmem:[%s1 + $0x60] sm:$0xff]
    %v292 = vld [vmem:[%s1 + $0x68] sm:$0xff]
    %v293 = vld [vmem:[%s1 + $0x70] sm:$0xff]
    %v294 = vld [vmem:[%s1 + $0x78] sm:$0xff]
    %v295 = vld [vmem:[%s1 + $0x80] sm:$0xff]
    %v296 = vld [vmem:[%s1 + $0x88] sm:$0xff]
    %v297 = vld [vmem:[%s1 + $0x90] sm:$0xff]
    %v298 = vld [vmem:[%s1 + $0x98] sm:$0xff]
    %v299 = vld [vmem:[%s1 + $0xa0] sm:$0xff]
    %v300 = vld [vmem:[%s1 + $0xa8] sm:$0xff]
    %v301 = vld [vmem:[%s1 + $0xb0] sm:$0xff]
    %v302 = vld [vmem:[%s1 + $0xb8] sm:$0xff]
    %303 = vmatprep.subr.mxu0 0.0
    %304 = vmatpush1.msra.mxu0 0.0
    %305 = vmatprep.subr.mxu0 0.0
    %306 = vmatpush1.msra.mxu0 0.0
    %307 = vmatprep.subr.mxu0 0.0
    %308 = vmatpush1.msra.mxu0 0.0
    %309 = vmatprep.subr.mxu0 0.0
    %310 = vmatpush1.msra.mxu0 0.0
    %311 = vmatprep.subr.mxu0 0.0
    %312 = vmatpush1.msra.mxu0 %v302
    %313 = vmatprep.subr.mxu0 0.0
    %314 = vmatpush1.msra.mxu0 %v301
    %315 = vmatprep.subr.mxu0 0.0
    %316 = vmatpush1.msra.mxu0 %v300
    %317 = vmatprep.subr.mxu0 0.0
    %318 = vmatpush1.msra.mxu0 %v299
    %319 = vmatprep.subr.mxu0 0.0
    %320 = vmatpush1.msra.mxu0 %v298
    %321 = vmatprep.subr.mxu0 0.0
    %322 = vmatpush1.msra.mxu0 %v297
    %323 = vmatprep.subr.mxu0 0.0
    %324 = vmatpush1.msra.mxu0 %v296
    %325 = vmatprep.subr.mxu0 0.0
    %326 = vmatpush1.msra.mxu0 %v295
    %327 = vmatprep.subr.mxu0 0.0
    %328 = vmatpush1.msra.mxu0 %v294
    %329 = vmatprep.subr.mxu0 0.0
    %330 = vmatpush1.msra.mxu0 %v293
    %331 = vmatprep.subr.mxu0 0.0
    %332 = vmatpush1.msra.mxu0 %v292
    %333 = vmatprep.subr.mxu0 0.0
    %334 = vmatpush1.msra.mxu0 %v291
    %335 = vmatprep.subr.mxu0 0.0
    %336 = vmatpush2.msra.mxu0 0.0
    %337 = vmatprep.subr.mxu0 0.0
    %338 = vmatpush2.msra.mxu0 0.0
    %339 = vmatprep.subr.mxu0 0.0
    %340 = vmatpush2.msra.mxu0 0.0
    %341 = vmatprep.subr.mxu0 0.0
    %342 = vmatpush2.msra.mxu0 0.0
    %343 = vmatprep.subr.mxu0 0.0
    %344 = vmatpush2.msra.mxu0 0.0
    %345 = vmatprep.subr.mxu0 0.0
    %346 = vmatpush2.msra.mxu0 0.0
    %347 = vmatprep.subr.mxu0 0.0
    %348 = vmatpush2.msra.mxu0 0.0
    %349 = vmatprep.subr.mxu0 0.0
    %350 = vmatpush2.msra.mxu0 0.0
    %351 = vmatprep.subr.mxu0 0.0
    %352 = vmatpush2.msra.mxu0 0.0
    %353 = vmatprep.subr.mxu0 0.0
    %354 = vmatpush2.msra.mxu0 0.0
    %355 = vmatprep.subr.mxu0 0.0
    %356 = vmatpush2.msra.mxu0 0.0
    %357 = vmatprep.subr.mxu0 0.0
    %358 = vmatpush2.msra.mxu0 0.0
    %359 = vmatprep.subr.mxu0 0.0
    %360 = vmatpush2.msra.mxu0 0.0
    %361 = vmatprep.subr.mxu0 0.0
    %362 = vmatpush2.msra.mxu0 0.0
    %363 = vmatprep.subr.mxu0 0.0
    %364 = vmatpush2.msra.mxu0 0.0
    %365 = vmatprep.subr.mxu0 0.0
    %366 = vmatpush2.msra.mxu0 0.0
    %367 = vmatprep.mubr.f32.mxu0 0.0
    %368 = vmatmul.mubr.f32.gmra.mxu0 %v163
    %v369 = vpop.f32.mrf.mxu0
    %v370 = vadd.f32 0.0, %v369
    %v371 = vpop.f32.mrf.mxu0
    %372 = vmatprep.mubr.f32.mxu0 0.0
    %373 = vmatmul.mubr.f32.gmra.mxu0 %v166
    %v374 = vpop.f32.mrf.mxu0
    %v375 = vadd.f32 0.0, %v374
    %v376 = vpop.f32.mrf.mxu0
    %377 = vmatprep.mubr.f32.mxu0 0.0
    %378 = vmatmul.mubr.f32.gmra.mxu0 %v169
    %v379 = vpop.f32.mrf.mxu0
    %v380 = vadd.f32 0.0, %v379
    %v381 = vpop.f32.mrf.mxu0
    %382 = vmatprep.mubr.f32.mxu0 0.0
    %383 = vmatmul.mubr.f32.gmra.mxu0 %v172
    %v384 = vpop.f32.mrf.mxu0
    %v385 = vadd.f32 0.0, %v384
    %v386 = vpop.f32.mrf.mxu0
    %387 = vmatprep.mubr.f32.mxu0 0.0
    %388 = vmatmul.mubr.f32.gmra.mxu0 %v175
    %v389 = vpop.f32.mrf.mxu0
    %v390 = vadd.f32 0.0, %v389
    %v391 = vpop.f32.mrf.mxu0
    %392 = vmatprep.mubr.f32.mxu0 0.0
    %393 = vmatmul.mubr.f32.gmra.mxu0 %v178
    %v394 = vpop.f32.mrf.mxu0
    %v395 = vadd.f32 0.0, %v394
    %v396 = vpop.f32.mrf.mxu0
    %397 = vmatprep.mubr.f32.mxu0 0.0
    %398 = vmatmul.mubr.f32.gmra.mxu0 %v181
    %v399 = vpop.f32.mrf.mxu0
    %v400 = vadd.f32 0.0, %v399
    %v401 = vpop.f32.mrf.mxu0
    %402 = vmatprep.mubr.f32.mxu0 0.0
    %403 = vmatmul.mubr.f32.gmra.mxu0 %v184
    %v404 = vpop.f32.mrf.mxu0
    %v405 = vadd.f32 0.0, %v404
    %v406 = vpop.f32.mrf.mxu0
    %407 = vdwg.mxu0
    %v408 = vsel %vm161, %v253, 0.0
    %v409 = vsel %vm161, %v258, 0.0
    %v410 = vadd.f32 %v408, %v409
    %v411 = vsel %vm161, %v263, 0.0
    %v412 = vadd.f32 %v410, %v411
    %v413 = vsel %vm161, %v268, 0.0
    %v414 = vadd.f32 %v412, %v413
    %v415 = vsel %vm161, %v273, 0.0
    %v416 = vadd.f32 %v414, %v415
    %v417 = vsel %vm161, %v278, 0.0
    %v418 = vadd.f32 %v416, %v417
    %v419 = vsel %vm161, %v283, 0.0
    %v420 = vadd.f32 %v418, %v419
    %v421 = vsel %vm161, %v288, 0.0
    %v422 = vadd.f32 %v420, %v421
    %v423 = vrot.slane %v422, 4
    %v424 = vadd.f32 %v422, %v423
    %v425 = vrot.slane %v424, 2
    %v426 = vadd.f32 %v424, %v425
    %v427 = vrot.slane %v426, 1
    %v428 = vadd.f32 %v426, %v427
    %v429 = vsel %vm161, %v370, 0.0
    %v430 = vsel %vm161, %v375, 0.0
    %v431 = vadd.f32 %v429, %v430
    %v432 = vsel %vm161, %v380, 0.0
    %v433 = vadd.f32 %v431, %v432
    %v434 = vsel %vm161, %v385, 0.0
    %v435 = vadd.f32 %v433, %v434
    %v436 = vsel %vm161, %v390, 0.0
    %v437 = vadd.f32 %v435, %v436
    %v438 = vsel %vm161, %v395, 0.0
    %v439 = vadd.f32 %v437, %v438
    %v440 = vsel %vm161, %v400, 0.0
    %v441 = vadd.f32 %v439, %v440
    %v442 = vsel %vm161, %v405, 0.0
    %v443 = vadd.f32 %v441, %v442
    %v444 = vrot.slane %v443, 4
    %v445 = vadd.f32 %v443, %v444
    %v446 = vrot.slane %v445, 2
    %v447 = vadd.f32 %v445, %v446
    %v448 = vrot.slane %v447, 1
    %v449 = vadd.f32 %v447, %v448
    %v450 = vadd.f32 %v428, %v449
    %v451 = vmul.f32 %v253, %v253
    %v452 = vmul.f32 %v258, %v258
    %v453 = vmul.f32 %v263, %v263
    %v454 = vmul.f32 %v268, %v268
    %v455 = vmul.f32 %v273, %v273
    %v456 = vmul.f32 %v278, %v278
    %v457 = vmul.f32 %v283, %v283
    %v458 = vmul.f32 %v288, %v288
    %v459 = vsel %vm161, %v451, 0.0
    %v460 = vsel %vm161, %v452, 0.0
    %v461 = vadd.f32 %v459, %v460
    %v462 = vsel %vm161, %v453, 0.0
    %v463 = vadd.f32 %v461, %v462
    %v464 = vsel %vm161, %v454, 0.0
    %v465 = vadd.f32 %v463, %v464
    %v466 = vsel %vm161, %v455, 0.0
    %v467 = vadd.f32 %v465, %v466
    %v468 = vsel %vm161, %v456, 0.0
    %v469 = vadd.f32 %v467, %v468
    %v470 = vsel %vm161, %v457, 0.0
    %v471 = vadd.f32 %v469, %v470
    %v472 = vsel %vm161, %v458, 0.0
    %v473 = vadd.f32 %v471, %v472
    %v474 = vrot.slane %v473, 4
    %v475 = vadd.f32 %v473, %v474
    %v476 = vrot.slane %v475, 2
    %v477 = vadd.f32 %v475, %v476
    %v478 = vrot.slane %v477, 1
    %v479 = vadd.f32 %v477, %v478
    %v480 = vmul.f32 %v370, %v370
    %v481 = vmul.f32 %v375, %v375
    %v482 = vmul.f32 %v380, %v380
    %v483 = vmul.f32 %v385, %v385
    %v484 = vmul.f32 %v390, %v390
    %v485 = vmul.f32 %v395, %v395
    %v486 = vmul.f32 %v400, %v400
    %v487 = vmul.f32 %v405, %v405
    %v488 = vsel %vm161, %v480, 0.0
    %v489 = vsel %vm161, %v481, 0.0
    %v490 = vadd.f32 %v488, %v489
    %v491 = vsel %vm161, %v482, 0.0
    %v492 = vadd.f32 %v490, %v491
    %v493 = vsel %vm161, %v483, 0.0
    %v494 = vadd.f32 %v492, %v493
    %v495 = vsel %vm161, %v484, 0.0
    %v496 = vadd.f32 %v494, %v495
    %v497 = vsel %vm161, %v485, 0.0
    %v498 = vadd.f32 %v496, %v497
    %v499 = vsel %vm161, %v486, 0.0
    %v500 = vadd.f32 %v498, %v499
    %v501 = vsel %vm161, %v487, 0.0
    %v502 = vadd.f32 %v500, %v501
    %v503 = vrot.slane %v502, 4
    %v504 = vadd.f32 %v502, %v503
    %v505 = vrot.slane %v504, 2
    %v506 = vadd.f32 %v504, %v505
    %v507 = vrot.slane %v506, 1
    %v508 = vadd.f32 %v506, %v507
    %v509 = vadd.f32 %v479, %v508
    %vm510 = vcmask 1040384
    %v511 = vsel %vm510, %v450, %v509
    %v512 = vld [vmem:[%s1 + $0xc0] sm:$0xff]
    %v513 = vld [vmem:[%s1 + $0xc8] sm:$0xff]
    %v514 = vld [vmem:[%s1 + $0xd0] sm:$0xff]
    %v515 = vld [vmem:[%s1 + $0xd8] sm:$0xff]
    %v516 = vld [vmem:[%s1 + $0xe0] sm:$0xff]
    %v517 = vld [vmem:[%s1 + $0xe8] sm:$0xff]
    %v518 = vld [vmem:[%s1 + $0xf0] sm:$0xff]
    %v519 = vld [vmem:[%s1 + $0xf8] sm:$0xff]
    %v520 = vld [vmem:[%s1 + $0x100] sm:$0xff]
    %v521 = vld [vmem:[%s1 + $0x108] sm:$0xff]
    %v522 = vld [vmem:[%s1 + $0x110] sm:$0xff]
    %v523 = vld [vmem:[%s1 + $0x118] sm:$0xff]
    %v525 = vsel %vm161, %v511, 0
    %527 = vmatprep.subr.mxu0 0.0
    %528 = vmatpush1.msra.mxu0 0.0
    %529 = vmatprep.subr.mxu0 0.0
    %530 = vmatpush1.msra.mxu0 0.0
    %531 = vmatprep.subr.mxu0 0.0
    %532 = vmatpush1.msra.mxu0 0.0
    %533 = vmatprep.subr.mxu0 0.0
    %534 = vmatpush1.msra.mxu0 0.0
    %535 = vmatprep.subr.mxu0 0.0
    %536 = vmatpush1.msra.mxu0 %v523
    %537 = vmatprep.subr.mxu0 0.0
    %538 = vmatpush1.msra.mxu0 %v522
    %539 = vmatprep.subr.mxu0 0.0
    %540 = vmatpush1.msra.mxu0 %v521
    %541 = vmatprep.subr.mxu0 0.0
    %542 = vmatpush1.msra.mxu0 %v520
    %543 = vmatprep.subr.mxu0 0.0
    %544 = vmatpush1.msra.mxu0 %v519
    %545 = vmatprep.subr.mxu0 0.0
    %546 = vmatpush1.msra.mxu0 %v518
    %547 = vmatprep.subr.mxu0 0.0
    %548 = vmatpush1.msra.mxu0 %v517
    %549 = vmatprep.subr.mxu0 0.0
    %550 = vmatpush1.msra.mxu0 %v516
    %551 = vmatprep.subr.mxu0 0.0
    %552 = vmatpush1.msra.mxu0 %v515
    %553 = vmatprep.subr.mxu0 0.0
    %554 = vmatpush1.msra.mxu0 %v514
    %555 = vmatprep.subr.mxu0 0.0
    %556 = vmatpush1.msra.mxu0 %v513
    %557 = vmatprep.subr.mxu0 0.0
    %558 = vmatpush1.msra.mxu0 %v512
    %559 = vmatprep.subr.mxu0 0.0
    %560 = vmatpush2.msra.mxu0 0.0
    %561 = vmatprep.subr.mxu0 0.0
    %562 = vmatpush2.msra.mxu0 0.0
    %563 = vmatprep.subr.mxu0 0.0
    %564 = vmatpush2.msra.mxu0 0.0
    %565 = vmatprep.subr.mxu0 0.0
    %566 = vmatpush2.msra.mxu0 0.0
    %567 = vmatprep.subr.mxu0 0.0
    %568 = vmatpush2.msra.mxu0 0.0
    %569 = vmatprep.subr.mxu0 0.0
    %570 = vmatpush2.msra.mxu0 0.0
    %571 = vmatprep.subr.mxu0 0.0
    %572 = vmatpush2.msra.mxu0 0.0
    %573 = vmatprep.subr.mxu0 0.0
    %574 = vmatpush2.msra.mxu0 0.0
    %575 = vmatprep.subr.mxu0 0.0
    %576 = vmatpush2.msra.mxu0 0.0
    %577 = vmatprep.subr.mxu0 0.0
    %578 = vmatpush2.msra.mxu0 0.0
    %579 = vmatprep.subr.mxu0 0.0
    %580 = vmatpush2.msra.mxu0 0.0
    %581 = vmatprep.subr.mxu0 0.0
    %582 = vmatpush2.msra.mxu0 0.0
    %583 = vmatprep.subr.mxu0 0.0
    %584 = vmatpush2.msra.mxu0 0.0
    %585 = vmatprep.subr.mxu0 0.0
    %586 = vmatpush2.msra.mxu0 0.0
    %587 = vmatprep.subr.mxu0 0.0
    %588 = vmatpush2.msra.mxu0 0.0
    %589 = vmatprep.subr.mxu0 0.0
    %590 = vmatpush2.msra.mxu0 0.0
    %591 = vmatprep.mubr.f32.mxu0 0.0
    %592 = vmatmul.mubr.f32.gmra.mxu0 %v525
    %v593 = vpop.f32.mrf.mxu0
    %v594 = vadd.f32 0.0, %v593
    %v595 = vpop.f32.mrf.mxu0
    %596 = vdwg.mxu0
    %v597 = vrcp.pop 2048.0
    %v598 = vmul.f32 %v594, %v597
    %v599 = vmul.f32 %v598, %v598
    %v601 = vrot.slane %v599, 7
    %v603 = vsub.f32 %v598, %v601
    %v604 = vld [vmem:[%s1 + $0x120] sm:$0x3]
    %v605 = vadd.f32 %v603, 1e-05
    %v606 = vrsqrt.pop %v605
    %v608 = vrot.slane %v604, 7
    %v610 = vmul.f32 %v606, %v608
    %v612 = vrot.slane %v610, 1
    %v614 = vmul.f32 %v598, %v612
    %v616 = vrot.slane %v614, 7
    %v618 = vsub.f32 %v604, %v616
    %v619 = vlaneseq
    %v620 = vshrl.u32 %v619, 7
    %v621 = vsub.s32 1, %v620
    %v622 = vrot.slane %v610, %v621
    %v623 = vmul.f32 %v253, %v622
    %v624 = vmul.f32 %v258, %v622
    %v625 = vmul.f32 %v263, %v622
    %v626 = vmul.f32 %v268, %v622
    %v627 = vmul.f32 %v273, %v622
    %v628 = vmul.f32 %v278, %v622
    %v629 = vmul.f32 %v283, %v622
    %v630 = vmul.f32 %v288, %v622
    %v631 = vlaneseq
    %v632 = vshrl.u32 %v631, 7
    %v633 = vsub.s32 1, %v632
    %v634 = vrot.slane %v618, %v633
    %v635 = vadd.f32 %v623, %v634
    %v636 = vadd.f32 %v624, %v634
    %v637 = vadd.f32 %v625, %v634
    %v638 = vadd.f32 %v626, %v634
    %v639 = vadd.f32 %v627, %v634
    %v640 = vadd.f32 %v628, %v634
    %v641 = vadd.f32 %v629, %v634
    %v642 = vadd.f32 %v630, %v634
    %v643 = vmul.f32 %v370, %v622
    %v644 = vmul.f32 %v375, %v622
    %v645 = vmul.f32 %v380, %v622
    %v646 = vmul.f32 %v385, %v622
    %v647 = vmul.f32 %v390, %v622
    %v648 = vmul.f32 %v395, %v622
    %v649 = vmul.f32 %v400, %v622
    %v650 = vmul.f32 %v405, %v622
    %v651 = vadd.f32 %v643, %v634
    %v652 = vadd.f32 %v644, %v634
    %v653 = vadd.f32 %v645, %v634
    %v654 = vadd.f32 %v646, %v634
    %v655 = vadd.f32 %v647, %v634
    %v656 = vadd.f32 %v648, %v634
    %v657 = vadd.f32 %v649, %v634
    %v658 = vadd.f32 %v650, %v634
    %v659 = vmax.f32 %v635, %v651
    %v660 = vmax.f32 %v636, %v652
    %v661 = vmax.f32 %v637, %v653
    %v662 = vmax.f32 %v638, %v654
    %v663 = vmax.f32 %v639, %v655
    %v664 = vmax.f32 %v640, %v656
    %v665 = vmax.f32 %v641, %v657
    %v666 = vmax.f32 %v642, %v658
    %v667 = vmax.f32 %v659, %v663
    %v668 = vmax.f32 %v660, %v664
    %v669 = vmax.f32 %v661, %v665
    %v670 = vmax.f32 %v662, %v666
    %vm671 = vcmask 778240
    %672 = vst.msk [vmem:[#allocation3] sm:$0x1] %vm671, 0.0
    %673 = vst.msk [vmem:[#allocation3 + $0x18] sm:$0x1] %vm671, 0.0
    %v676 = vrot.slane %v669, 7
    %v677 = vrot.slane %v670, 7
    %vm680 = vcmask 785409
    %681 = vst.msk [vmem:[#allocation3] sm:$0xfe] %vm680, %v676
    %682 = vst.msk [vmem:[#allocation3 + $0x18] sm:$0xfe] %vm680, %v677
    %685 = vrot.lane.b32.xlu0 %v667, 96
    %v686 = vpop.permute.xlu0 %685
    %687 = vrot.lane.b32.xlu0 %v668, 96
    %v688 = vpop.permute.xlu0 %687
    %vm691 = vcmask 1048320
    %692 = vst.msk [vmem:[#allocation3] sm:$0xff] %vm691, %v686
    %vm693 = vcmask 523264
    %694 = vst.msk [vmem:[#allocation3 + $0x8] sm:$0xff] %vm693, %v686
    %695 = vst.msk [vmem:[#allocation3 + $0x18] sm:$0xff] %vm691, %v688
    %696 = vst.msk [vmem:[#allocation3 + $0x20] sm:$0xff] %vm693, %v688
    %697 = vrot.lane.b32.xlu0 %v669, 64
    %v698 = vpop.permute.xlu0 %697
    %699 = vrot.lane.b32.xlu0 %v670, 64
    %v700 = vpop.permute.xlu0 %699
    %vm703 = vcmask 1048064
    %704 = vst.msk [vmem:[#allocation3 + $0x8] sm:$0xff] %vm703, %v698
    %705 = vst.msk [vmem:[#allocation3 + $0x10] sm:$0xff] %vm51, %v698
    %706 = vst.msk [vmem:[#allocation3 + $0x20] sm:$0xff] %vm703, %v700
    %707 = vst.msk [vmem:[#allocation3 + $0x28] sm:$0xff] %vm51, %v700
    %s708 = scalar_lea.vmem [#allocation3], 48
    %709 = vst.msk [vmem:[%s708] sm:$0xff] %vm161, %v667
    %710 = vst.msk [vmem:[%s708 + $0x18] sm:$0xff] %vm161, %v668
    %711 = vrot.lane.b32.xlu0 %v669, 96
    %v712 = vpop.permute.xlu0 %711
    %713 = vrot.lane.b32.xlu0 %v670, 96
    %v714 = vpop.permute.xlu0 %713
    %717 = vst.msk [vmem:[%s708] sm:$0xff] %vm691, %v712
    %718 = vst.msk [vmem:[%s708 + $0x8] sm:$0xff] %vm693, %v712
    %719 = vst.msk [vmem:[%s708 + $0x18] sm:$0xff] %vm691, %v714
    %720 = vst.msk [vmem:[%s708 + $0x20] sm:$0xff] %vm693, %v714
    %vm721 = vcmask 1040896
    %722 = vst.msk [vmem:[%s708 + $0xf] sm:$0x1] %vm721, 0.0
    %723 = vst.msk [vmem:[%s708 + $0x17] sm:$0x1] %vm12, 0.0
    %724 = vst.msk [vmem:[%s708 + $0x27] sm:$0x1] %vm721, 0.0
    %725 = vst.msk [vmem:[%s708 + $0x2f] sm:$0x1] %vm12, 0.0
    %v726 = vrot.slane %v667, 1
    %v727 = vrot.slane %v668, 1
    %728 = vrot.lane.b32.xlu0 %v726, 64
    %v729 = vpop.permute.xlu0 %728
    %730 = vrot.lane.b32.xlu0 %v727, 64
    %v731 = vpop.permute.xlu0 %730
    %vm734 = vcmask 1047040
    %735 = vst.msk [vmem:[%s708 + $0x8] sm:$0x7f] %vm734, %v729
    %736 = vst.msk [vmem:[%s708 + $0x10] sm:$0x7f] %vm18, %v729
    %737 = vst.msk [vmem:[%s708 + $0x20] sm:$0x7f] %vm734, %v731
    %738 = vst.msk [vmem:[%s708 + $0x28] sm:$0x7f] %vm18, %v731
    %v739 = vld [vmem:[#allocation3] sm:$0xff]
    %v740 = vld [vmem:[#allocation3 + $0x8] sm:$0xff]
    %v741 = vld [vmem:[#allocation3 + $0x10] sm:$0xff]
    %v742 = vld [vmem:[#allocation3 + $0x18] sm:$0xff]
    %v743 = vld [vmem:[#allocation3 + $0x20] sm:$0xff]
    %v744 = vld [vmem:[#allocation3 + $0x28] sm:$0xff]
    %v745 = vld [vmem:[#allocation3 + $0x30] sm:$0xff]
    %v746 = vld [vmem:[#allocation3 + $0x38] sm:$0xff]
    %v747 = vld [vmem:[#allocation3 + $0x40] sm:$0xff]
    %v748 = vld [vmem:[#allocation3 + $0x48] sm:$0xff]
    %v749 = vld [vmem:[#allocation3 + $0x50] sm:$0xff]
    %v750 = vld [vmem:[#allocation3 + $0x58] sm:$0xff]
    %v751 = vld [vmem:[%s1 + $0x128] sm:$0xff]
    %v752 = vld [vmem:[%s1 + $0x130] sm:$0xff]
    %v753 = vld [vmem:[%s1 + $0x138] sm:$0xff]
    %v754 = vld [vmem:[%s1 + $0x140] sm:$0xff]
    %v755 = vld [vmem:[%s1 + $0x148] sm:$0xff]
    %v756 = vld [vmem:[%s1 + $0x150] sm:$0xff]
    %v757 = vld [vmem:[%s1 + $0x158] sm:$0xff]
    %v758 = vld [vmem:[%s1 + $0x160] sm:$0xff]
    %v759 = vld [vmem:[%s1 + $0x168] sm:$0xff]
    %v760 = vld [vmem:[%s1 + $0x170] sm:$0xff]
    %v761 = vld [vmem:[%s1 + $0x178] sm:$0xff]
    %v762 = vld [vmem:[%s1 + $0x180] sm:$0xff]
    %v763 = vld [vmem:[%s1 + $0x188] sm:$0xff]
    %v764 = vld [vmem:[%s1 + $0x190] sm:$0xff]
    %v765 = vld [vmem:[%s1 + $0x198] sm:$0xff]
    %v766 = vld [vmem:[%s1 + $0x1a0] sm:$0xff]
    %v767 = vld [vmem:[%s1 + $0x1a8] sm:$0xff]
    %v768 = vld [vmem:[%s1 + $0x1b0] sm:$0xff]
    %v769 = vld [vmem:[%s1 + $0x1b8] sm:$0xff]
    %v770 = vld [vmem:[%s1 + $0x1c0] sm:$0xff]
    %v771 = vld [vmem:[%s1 + $0x1c8] sm:$0xff]
    %v772 = vld [vmem:[%s1 + $0x1d0] sm:$0xff]
    %v773 = vld [vmem:[%s1 + $0x1d8] sm:$0xff]
    %v774 = vld [vmem:[%s1 + $0x1e0] sm:$0xff]
    %v775 = vld [vmem:[%s1 + $0x1e8] sm:$0xff]
    %v776 = vld [vmem:[%s1 + $0x1f0] sm:$0xff]
    %v777 = vld [vmem:[%s1 + $0x1f8] sm:$0xff]
    %v778 = vld [vmem:[%s1 + $0x200] sm:$0xff]
    %v779 = vld [vmem:[%s1 + $0x208] sm:$0xff]
    %v780 = vld [vmem:[%s1 + $0x210] sm:$0xff]
    %v781 = vld [vmem:[%s1 + $0x218] sm:$0xff]
    %v782 = vld [vmem:[%s1 + $0x220] sm:$0xff]
    %v783 = vld [vmem:[%s1 + $0x228] sm:$0xff]
    %v784 = vld [vmem:[%s1 + $0x230] sm:$0xff]
    %v785 = vld [vmem:[%s1 + $0x238] sm:$0xff]
    %v786 = vld [vmem:[%s1 + $0x240] sm:$0xff]
    %v788 = vsel %vm51, %v741, 0
    %v791 = vsel %vm51, %v744, 0
    %v794 = vsel %vm51, %v747, 0
    %v797 = vsel %vm51, %v750, 0
    %799 = vmatprep.subr.mxu0 0.0
    %800 = vmatpush1.msra.mxu0 %v766
    %801 = vmatprep.subr.mxu0 0.0
    %802 = vmatpush1.msra.mxu0 %v765
    %803 = vmatprep.subr.mxu0 0.0
    %804 = vmatpush1.msra.mxu0 %v764
    %805 = vmatprep.subr.mxu0 0.0
    %806 = vmatpush1.msra.mxu0 %v763
    %807 = vmatprep.subr.mxu0 0.0
    %808 = vmatpush1.msra.mxu0 %v762
    %809 = vmatprep.subr.mxu0 0.0
    %810 = vmatpush1.msra.mxu0 %v761
    %811 = vmatprep.subr.mxu0 0.0
    %812 = vmatpush1.msra.mxu0 %v760
    %813 = vmatprep.subr.mxu0 0.0
    %814 = vmatpush1.msra.mxu0 %v759
    %815 = vmatprep.subr.mxu0 0.0
    %816 = vmatpush1.msra.mxu0 %v758
    %817 = vmatprep.subr.mxu0 0.0
    %818 = vmatpush1.msra.mxu0 %v757
    %819 = vmatprep.subr.mxu0 0.0
    %820 = vmatpush1.msra.mxu0 %v756
    %821 = vmatprep.subr.mxu0 0.0
    %822 = vmatpush1.msra.mxu0 %v755
    %823 = vmatprep.subr.mxu0 0.0
    %824 = vmatpush1.msra.mxu0 %v754
    %825 = vmatprep.subr.mxu0 0.0
    %826 = vmatpush1.msra.mxu0 %v753
    %827 = vmatprep.subr.mxu0 0.0
    %828 = vmatpush1.msra.mxu0 %v752
    %829 = vmatprep.subr.mxu0 0.0
    %830 = vmatpush1.msra.mxu0 %v751
    %831 = vmatprep.subr.mxu0 0.0
    %832 = vmatpush2.msra.mxu0 %v782
    %833 = vmatprep.subr.mxu0 0.0
    %834 = vmatpush2.msra.mxu0 %v781
    %835 = vmatprep.subr.mxu0 0.0
    %836 = vmatpush2.msra.mxu0 %v780
    %837 = vmatprep.subr.mxu0 0.0
    %838 = vmatpush2.msra.mxu0 %v779
    %839 = vmatprep.subr.mxu0 0.0
    %840 = vmatpush2.msra.mxu0 %v778
    %841 = vmatprep.subr.mxu0 0.0
    %842 = vmatpush2.msra.mxu0 %v777
    %843 = vmatprep.subr.mxu0 0.0
    %844 = vmatpush2.msra.mxu0 %v776
    %845 = vmatprep.subr.mxu0 0.0
    %846 = vmatpush2.msra.mxu0 %v775
    %847 = vmatprep.subr.mxu0 0.0
    %848 = vmatpush2.msra.mxu0 %v774
    %849 = vmatprep.subr.mxu0 0.0
    %850 = vmatpush2.msra.mxu0 %v773
    %851 = vmatprep.subr.mxu0 0.0
    %852 = vmatpush2.msra.mxu0 %v772
    %853 = vmatprep.subr.mxu0 0.0
    %854 = vmatpush2.msra.mxu0 %v771
    %855 = vmatprep.subr.mxu0 0.0
    %856 = vmatpush2.msra.mxu0 %v770
    %857 = vmatprep.subr.mxu0 0.0
    %858 = vmatpush2.msra.mxu0 %v769
    %859 = vmatprep.subr.mxu0 0.0
    %860 = vmatpush2.msra.mxu0 %v768
    %861 = vmatprep.subr.mxu0 0.0
    %862 = vmatpush2.msra.mxu0 %v767
    %863 = vmatprep.mubr.f32.mxu0 %v740
    %864 = vmatmul.mubr.f32.gmra.mxu0 %v739
    %v865 = vpop.f32.mrf.mxu0
    %v866 = vadd.f32 0.0, %v865
    %v867 = vpop.f32.mrf.mxu0
    %868 = vmatprep.mubr.f32.mxu0 %v743
    %869 = vmatmul.mubr.f32.gmra.mxu0 %v742
    %v870 = vpop.f32.mrf.mxu0
    %v871 = vadd.f32 0.0, %v870
    %v872 = vpop.f32.mrf.mxu0
    %873 = vmatprep.mubr.f32.mxu0 %v746
    %874 = vmatmul.mubr.f32.gmra.mxu0 %v745
    %v875 = vpop.f32.mrf.mxu0
    %v876 = vadd.f32 0.0, %v875
    %v877 = vpop.f32.mrf.mxu0
    %878 = vmatprep.mubr.f32.mxu0 %v749
    %879 = vmatmul.mubr.f32.gmra.mxu0 %v748
    %v880 = vpop.f32.mrf.mxu0
    %v881 = vadd.f32 0.0, %v880
    %v882 = vpop.f32.mrf.mxu0
    %883 = vdwg.mxu0
    %884 = vmatprep.subr.mxu0 0.0
    %885 = vmatpush1.msra.mxu0 0.0
    %886 = vmatprep.subr.mxu0 0.0
    %887 = vmatpush1.msra.mxu0 0.0
    %888 = vmatprep.subr.mxu0 0.0
    %889 = vmatpush1.msra.mxu0 0.0
    %890 = vmatprep.subr.mxu0 0.0
    %891 = vmatpush1.msra.mxu0 0.0
    %892 = vmatprep.subr.mxu0 0.0
    %893 = vmatpush1.msra.mxu0 0.0
    %894 = vmatprep.subr.mxu0 0.0
    %895 = vmatpush1.msra.mxu0 0.0
    %896 = vmatprep.subr.mxu0 0.0
    %897 = vmatpush1.msra.mxu0 0.0
    %898 = vmatprep.subr.mxu0 0.0
    %899 = vmatpush1.msra.mxu0 0.0
    %900 = vmatprep.subr.mxu0 0.0
    %901 = vmatpush1.msra.mxu0 0.0
    %902 = vmatprep.subr.mxu0 0.0
    %903 = vmatpush1.msra.mxu0 0.0
    %904 = vmatprep.subr.mxu0 0.0
    %905 = vmatpush1.msra.mxu0 0.0
    %906 = vmatprep.subr.mxu0 0.0
    %907 = vmatpush1.msra.mxu0 0.0
    %908 = vmatprep.subr.mxu0 0.0
    %909 = vmatpush1.msra.mxu0 %v786
    %910 = vmatprep.subr.mxu0 0.0
    %911 = vmatpush1.msra.mxu0 %v785
    %912 = vmatprep.subr.mxu0 0.0
    %913 = vmatpush1.msra.mxu0 %v784
    %914 = vmatprep.subr.mxu0 0.0
    %915 = vmatpush1.msra.mxu0 %v783
    %916 = vmatprep.subr.mxu0 0.0
    %917 = vmatpush2.msra.mxu0 0.0
    %918 = vmatprep.subr.mxu0 0.0
    %919 = vmatpush2.msra.mxu0 0.0
    %920 = vmatprep.subr.mxu0 0.0
    %921 = vmatpush2.msra.mxu0 0.0
    %922 = vmatprep.subr.mxu0 0.0
    %923 = vmatpush2.msra.mxu0 0.0
    %924 = vmatprep.subr.mxu0 0.0
    %925 = vmatpush2.msra.mxu0 0.0
    %926 = vmatprep.subr.mxu0 0.0
    %927 = vmatpush2.msra.mxu0 0.0
    %928 = vmatprep.subr.mxu0 0.0
    %929 = vmatpush2.msra.mxu0 0.0
    %930 = vmatprep.subr.mxu0 0.0
    %931 = vmatpush2.msra.mxu0 0.0
    %932 = vmatprep.subr.mxu0 0.0
    %933 = vmatpush2.msra.mxu0 0.0
    %934 = vmatprep.subr.mxu0 0.0
    %935 = vmatpush2.msra.mxu0 0.0
    %936 = vmatprep.subr.mxu0 0.0
    %937 = vmatpush2.msra.mxu0 0.0
    %938 = vmatprep.subr.mxu0 0.0
    %939 = vmatpush2.msra.mxu0 0.0
    %940 = vmatprep.subr.mxu0 0.0
    %941 = vmatpush2.msra.mxu0 0.0
    %942 = vmatprep.subr.mxu0 0.0
    %943 = vmatpush2.msra.mxu0 0.0
    %944 = vmatprep.subr.mxu0 0.0
    %945 = vmatpush2.msra.mxu0 0.0
    %946 = vmatprep.subr.mxu0 0.0
    %947 = vmatpush2.msra.mxu0 0.0
    %948 = vmatprep.mubr.f32.mxu0 0.0
    %949 = vmatmul.mubr.f32.gmra.mxu0 %v788
    %v950 = vpop.f32.mrf.mxu0
    %v951 = vadd.f32 %v866, %v950
    %v952 = vpop.f32.mrf.mxu0
    %953 = vmatprep.mubr.f32.mxu0 0.0
    %954 = vmatmul.mubr.f32.gmra.mxu0 %v791
    %v955 = vpop.f32.mrf.mxu0
    %v956 = vadd.f32 %v871, %v955
    %v957 = vpop.f32.mrf.mxu0
    %958 = vmatprep.mubr.f32.mxu0 0.0
    %959 = vmatmul.mubr.f32.gmra.mxu0 %v794
    %v960 = vpop.f32.mrf.mxu0
    %v961 = vadd.f32 %v876, %v960
    %v962 = vpop.f32.mrf.mxu0
    %963 = vmatprep.mubr.f32.mxu0 0.0
    %964 = vmatmul.mubr.f32.gmra.mxu0 %v797
    %v965 = vpop.f32.mrf.mxu0
    %v966 = vadd.f32 %v881, %v965
    %v967 = vpop.f32.mrf.mxu0
    %968 = vdwg.mxu0
    %v969 = vld [vmem:[%s1 + $0x248] sm:$0xff]
    %v970 = vld [vmem:[%s1 + $0x250] sm:$0xff]
    %v971 = vld [vmem:[%s1 + $0x258] sm:$0xff]
    %v972 = vld [vmem:[%s1 + $0x260] sm:$0xff]
    %v973 = vld [vmem:[%s1 + $0x268] sm:$0xff]
    %v974 = vld [vmem:[%s1 + $0x270] sm:$0xff]
    %v975 = vld [vmem:[%s1 + $0x278] sm:$0xff]
    %v976 = vld [vmem:[%s1 + $0x280] sm:$0xff]
    %v977 = vld [vmem:[%s1 + $0x288] sm:$0xff]
    %v978 = vld [vmem:[%s1 + $0x290] sm:$0xff]
    %v979 = vld [vmem:[%s1 + $0x298] sm:$0xff]
    %v980 = vld [vmem:[%s1 + $0x2a0] sm:$0xff]
    %v981 = vld [vmem:[%s1 + $0x2a8] sm:$0xff]
    %v982 = vld [vmem:[%s1 + $0x2b0] sm:$0xff]
    %v983 = vld [vmem:[%s1 + $0x2b8] sm:$0xff]
    %v984 = vld [vmem:[%s1 + $0x2c0] sm:$0xff]
    %v985 = vld [vmem:[%s1 + $0x2c8] sm:$0xff]
    %v986 = vld [vmem:[%s1 + $0x2d0] sm:$0xff]
    %v987 = vld [vmem:[%s1 + $0x2d8] sm:$0xff]
    %v988 = vld [vmem:[%s1 + $0x2e0] sm:$0xff]
    %v989 = vld [vmem:[%s1 + $0x2e8] sm:$0xff]
    %v990 = vld [vmem:[%s1 + $0x2f0] sm:$0xff]
    %v991 = vld [vmem:[%s1 + $0x2f8] sm:$0xff]
    %v992 = vld [vmem:[%s1 + $0x300] sm:$0xff]
    %v993 = vld [vmem:[%s1 + $0x308] sm:$0xff]
    %v994 = vld [vmem:[%s1 + $0x310] sm:$0xff]
    %v995 = vld [vmem:[%s1 + $0x318] sm:$0xff]
    %v996 = vld [vmem:[%s1 + $0x320] sm:$0xff]
    %v997 = vld [vmem:[%s1 + $0x328] sm:$0xff]
    %v998 = vld [vmem:[%s1 + $0x330] sm:$0xff]
    %v999 = vld [vmem:[%s1 + $0x338] sm:$0xff]
    %v1000 = vld [vmem:[%s1 + $0x340] sm:$0xff]
    %v1001 = vld [vmem:[%s1 + $0x348] sm:$0xff]
    %v1002 = vld [vmem:[%s1 + $0x350] sm:$0xff]
    %v1003 = vld [vmem:[%s1 + $0x358] sm:$0xff]
    %v1004 = vld [vmem:[%s1 + $0x360] sm:$0xff]
    %1005 = vmatprep.subr.mxu0 0.0
    %1006 = vmatpush1.msra.mxu0 %v984
    %1007 = vmatprep.subr.mxu0 0.0
    %1008 = vmatpush1.msra.mxu0 %v983
    %1009 = vmatprep.subr.mxu0 0.0
    %1010 = vmatpush1.msra.mxu0 %v982
    %1011 = vmatprep.subr.mxu0 0.0
    %1012 = vmatpush1.msra.mxu0 %v981
    %1013 = vmatprep.subr.mxu0 0.0
    %1014 = vmatpush1.msra.mxu0 %v980
    %1015 = vmatprep.subr.mxu0 0.0
    %1016 = vmatpush1.msra.mxu0 %v979
    %1017 = vmatprep.subr.mxu0 0.0
    %1018 = vmatpush1.msra.mxu0 %v978
    %1019 = vmatprep.subr.mxu0 0.0
    %1020 = vmatpush1.msra.mxu0 %v977
    %1021 = vmatprep.subr.mxu0 0.0
    %1022 = vmatpush1.msra.mxu0 %v976
    %1023 = vmatprep.subr.mxu0 0.0
    %1024 = vmatpush1.msra.mxu0 %v975
    %1025 = vmatprep.subr.mxu0 0.0
    %1026 = vmatpush1.msra.mxu0 %v974
    %1027 = vmatprep.subr.mxu0 0.0
    %1028 = vmatpush1.msra.mxu0 %v973
    %1029 = vmatprep.subr.mxu0 0.0
    %1030 = vmatpush1.msra.mxu0 %v972
    %1031 = vmatprep.subr.mxu0 0.0
    %1032 = vmatpush1.msra.mxu0 %v971
    %1033 = vmatprep.subr.mxu0 0.0
    %1034 = vmatpush1.msra.mxu0 %v970
    %1035 = vmatprep.subr.mxu0 0.0
    %1036 = vmatpush1.msra.mxu0 %v969
    %1037 = vmatprep.subr.mxu0 0.0
    %1038 = vmatpush2.msra.mxu0 %v1000
    %1039 = vmatprep.subr.mxu0 0.0
    %1040 = vmatpush2.msra.mxu0 %v999
    %1041 = vmatprep.subr.mxu0 0.0
    %1042 = vmatpush2.msra.mxu0 %v998
    %1043 = vmatprep.subr.mxu0 0.0
    %1044 = vmatpush2.msra.mxu0 %v997
    %1045 = vmatprep.subr.mxu0 0.0
    %1046 = vmatpush2.msra.mxu0 %v996
    %1047 = vmatprep.subr.mxu0 0.0
    %1048 = vmatpush2.msra.mxu0 %v995
    %1049 = vmatprep.subr.mxu0 0.0
    %1050 = vmatpush2.msra.mxu0 %v994
    %1051 = vmatprep.subr.mxu0 0.0
    %1052 = vmatpush2.msra.mxu0 %v993
    %1053 = vmatprep.subr.mxu0 0.0
    %1054 = vmatpush2.msra.mxu0 %v992
    %1055 = vmatprep.subr.mxu0 0.0
    %1056 = vmatpush2.msra.mxu0 %v991
    %1057 = vmatprep.subr.mxu0 0.0
    %1058 = vmatpush2.msra.mxu0 %v990
    %1059 = vmatprep.subr.mxu0 0.0
    %1060 = vmatpush2.msra.mxu0 %v989
    %1061 = vmatprep.subr.mxu0 0.0
    %1062 = vmatpush2.msra.mxu0 %v988
    %1063 = vmatprep.subr.mxu0 0.0
    %1064 = vmatpush2.msra.mxu0 %v987
    %1065 = vmatprep.subr.mxu0 0.0
    %1066 = vmatpush2.msra.mxu0 %v986
    %1067 = vmatprep.subr.mxu0 0.0
    %1068 = vmatpush2.msra.mxu0 %v985
    %1069 = vmatprep.mubr.f32.mxu0 %v740
    %1070 = vmatmul.mubr.f32.gmra.mxu0 %v739
    %v1071 = vpop.f32.mrf.mxu0
    %v1072 = vadd.f32 0.0, %v1071
    %v1073 = vpop.f32.mrf.mxu0
    %1074 = vmatprep.mubr.f32.mxu0 %v743
    %1075 = vmatmul.mubr.f32.gmra.mxu0 %v742
    %v1076 = vpop.f32.mrf.mxu0
    %v1077 = vadd.f32 0.0, %v1076
    %v1078 = vpop.f32.mrf.mxu0
    %1079 = vmatprep.mubr.f32.mxu0 %v746
    %1080 = vmatmul.mubr.f32.gmra.mxu0 %v745
    %v1081 = vpop.f32.mrf.mxu0
    %v1082 = vadd.f32 0.0, %v1081
    %v1083 = vpop.f32.mrf.mxu0
    %1084 = vmatprep.mubr.f32.mxu0 %v749
    %1085 = vmatmul.mubr.f32.gmra.mxu0 %v748
    %v1086 = vpop.f32.mrf.mxu0
    %v1087 = vadd.f32 0.0, %v1086
    %v1088 = vpop.f32.mrf.mxu0
    %1089 = vdwg.mxu0
    %1090 = vmatprep.subr.mxu0 0.0
    %1091 = vmatpush1.msra.mxu0 0.0
    %1092 = vmatprep.subr.mxu0 0.0
    %1093 = vmatpush1.msra.mxu0 0.0
    %1094 = vmatprep.subr.mxu0 0.0
    %1095 = vmatpush1.msra.mxu0 0.0
    %1096 = vmatprep.subr.mxu0 0.0
    %1097 = vmatpush1.msra.mxu0 0.0
    %1098 = vmatprep.subr.mxu0 0.0
    %1099 = vmatpush1.msra.mxu0 0.0
    %1100 = vmatprep.subr.mxu0 0.0
    %1101 = vmatpush1.msra.mxu0 0.0
    %1102 = vmatprep.subr.mxu0 0.0
    %1103 = vmatpush1.msra.mxu0 0.0
    %1104 = vmatprep.subr.mxu0 0.0
    %1105 = vmatpush1.msra.mxu0 0.0
    %1106 = vmatprep.subr.mxu0 0.0
    %1107 = vmatpush1.msra.mxu0 0.0
    %1108 = vmatprep.subr.mxu0 0.0
    %1109 = vmatpush1.msra.mxu0 0.0
    %1110 = vmatprep.subr.mxu0 0.0
    %1111 = vmatpush1.msra.mxu0 0.0
    %1112 = vmatprep.subr.mxu0 0.0
    %1113 = vmatpush1.msra.mxu0 0.0
    %1114 = vmatprep.subr.mxu0 0.0
    %1115 = vmatpush1.msra.mxu0 %v1004
    %1116 = vmatprep.subr.mxu0 0.0
    %1117 = vmatpush1.msra.mxu0 %v1003
    %1118 = vmatprep.subr.mxu0 0.0
    %1119 = vmatpush1.msra.mxu0 %v1002
    %1120 = vmatprep.subr.mxu0 0.0
    %1121 = vmatpush1.msra.mxu0 %v1001
    %1122 = vmatprep.subr.mxu0 0.0
    %1123 = vmatpush2.msra.mxu0 0.0
    %1124 = vmatprep.subr.mxu0 0.0
    %1125 = vmatpush2.msra.mxu0 0.0
    %1126 = vmatprep.subr.mxu0 0.0
    %1127 = vmatpush2.msra.mxu0 0.0
    %1128 = vmatprep.subr.mxu0 0.0
    %1129 = vmatpush2.msra.mxu0 0.0
    %1130 = vmatprep.subr.mxu0 0.0
    %1131 = vmatpush2.msra.mxu0 0.0
    %1132 = vmatprep.subr.mxu0 0.0
    %1133 = vmatpush2.msra.mxu0 0.0
    %1134 = vmatprep.subr.mxu0 0.0
    %1135 = vmatpush2.msra.mxu0 0.0
    %1136 = vmatprep.subr.mxu0 0.0
    %1137 = vmatpush2.msra.mxu0 0.0
    %1138 = vmatprep.subr.mxu0 0.0
    %1139 = vmatpush2.msra.mxu0 0.0
    %1140 = vmatprep.subr.mxu0 0.0
    %1141 = vmatpush2.msra.mxu0 0.0
    %1142 = vmatprep.subr.mxu0 0.0
    %1143 = vmatpush2.msra.mxu0 0.0
    %1144 = vmatprep.subr.mxu0 0.0
    %1145 = vmatpush2.msra.mxu0 0.0
    %1146 = vmatprep.subr.mxu0 0.0
    %1147 = vmatpush2.msra.mxu0 0.0
    %1148 = vmatprep.subr.mxu0 0.0
    %1149 = vmatpush2.msra.mxu0 0.0
    %1150 = vmatprep.subr.mxu0 0.0
    %1151 = vmatpush2.msra.mxu0 0.0
    %1152 = vmatprep.subr.mxu0 0.0
    %1153 = vmatpush2.msra.mxu0 0.0
    %1154 = vmatprep.mubr.f32.mxu0 0.0
    %1155 = vmatmul.mubr.f32.gmra.mxu0 %v788
    %v1156 = vpop.f32.mrf.mxu0
    %v1157 = vadd.f32 %v1072, %v1156
    %v1158 = vpop.f32.mrf.mxu0
    %1159 = vmatprep.mubr.f32.mxu0 0.0
    %1160 = vmatmul.mubr.f32.gmra.mxu0 %v791
    %v1161 = vpop.f32.mrf.mxu0
    %v1162 = vadd.f32 %v1077, %v1161
    %v1163 = vpop.f32.mrf.mxu0
    %1164 = vmatprep.mubr.f32.mxu0 0.0
    %1165 = vmatmul.mubr.f32.gmra.mxu0 %v794
    %v1166 = vpop.f32.mrf.mxu0
    %v1167 = vadd.f32 %v1082, %v1166
    %v1168 = vpop.f32.mrf.mxu0
    %1169 = vmatprep.mubr.f32.mxu0 0.0
    %1170 = vmatmul.mubr.f32.gmra.mxu0 %v797
    %v1171 = vpop.f32.mrf.mxu0
    %v1172 = vadd.f32 %v1087, %v1171
    %v1173 = vpop.f32.mrf.mxu0
    %1174 = vdwg.mxu0
    %v1175 = vadd.f32 %v951, %v956
    %v1176 = vadd.f32 %v1175, %v961
    %v1177 = vadd.f32 %v1176, %v966
    %v1178 = vrot.slane %v1177, 4
    %v1179 = vadd.f32 %v1177, %v1178
    %v1180 = vrot.slane %v1179, 2
    %v1181 = vadd.f32 %v1179, %v1180
    %v1182 = vrot.slane %v1181, 1
    %v1183 = vadd.f32 %v1181, %v1182
    %v1184 = vadd.f32 %v1157, %v1162
    %v1185 = vadd.f32 %v1184, %v1167
    %v1186 = vadd.f32 %v1185, %v1172
    %v1187 = vrot.slane %v1186, 4
    %v1188 = vadd.f32 %v1186, %v1187
    %v1189 = vrot.slane %v1188, 2
    %v1190 = vadd.f32 %v1188, %v1189
    %v1191 = vrot.slane %v1190, 1
    %v1192 = vadd.f32 %v1190, %v1191
    %v1193 = vadd.f32 %v1183, %v1192
    %v1194 = vmul.f32 %v951, %v951
    %v1195 = vmul.f32 %v956, %v956
    %v1196 = vmul.f32 %v961, %v961
    %v1197 = vmul.f32 %v966, %v966
    %v1198 = vadd.f32 %v1194, %v1195
    %v1199 = vadd.f32 %v1198, %v1196
    %v1200 = vadd.f32 %v1199, %v1197
    %v1201 = vrot.slane %v1200, 4
    %v1202 = vadd.f32 %v1200, %v1201
    %v1203 = vrot.slane %v1202, 2
    %v1204 = vadd.f32 %v1202, %v1203
    %v1205 = vrot.slane %v1204, 1
    %v1206 = vadd.f32 %v1204, %v1205
    %v1207 = vmul.f32 %v1157, %v1157
    %v1208 = vmul.f32 %v1162, %v1162
    %v1209 = vmul.f32 %v1167, %v1167
    %v1210 = vmul.f32 %v1172, %v1172
    %v1211 = vadd.f32 %v1207, %v1208
    %v1212 = vadd.f32 %v1211, %v1209
    %v1213 = vadd.f32 %v1212, %v1210
    %v1214 = vrot.slane %v1213, 4
    %v1215 = vadd.f32 %v1213, %v1214
    %v1216 = vrot.slane %v1215, 2
    %v1217 = vadd.f32 %v1215, %v1216
    %v1218 = vrot.slane %v1217, 1
    %v1219 = vadd.f32 %v1217, %v1218
    %v1220 = vadd.f32 %v1206, %v1219
    %v1221 = vsel %vm510, %v1193, %v1220
    %v1222 = vld [vmem:[%s1 + $0x368] sm:$0xff]
    %v1223 = vld [vmem:[%s1 + $0x370] sm:$0xff]
    %v1224 = vld [vmem:[%s1 + $0x378] sm:$0xff]
    %v1225 = vld [vmem:[%s1 + $0x380] sm:$0xff]
    %v1226 = vld [vmem:[%s1 + $0x388] sm:$0xff]
    %v1227 = vld [vmem:[%s1 + $0x390] sm:$0xff]
    %v1228 = vld [vmem:[%s1 + $0x398] sm:$0xff]
    %v1229 = vld [vmem:[%s1 + $0x3a0] sm:$0xff]
    %v1230 = vld [vmem:[%s1 + $0x3a8] sm:$0xff]
    %v1231 = vld [vmem:[%s1 + $0x3b0] sm:$0xff]
    %v1232 = vld [vmem:[%s1 + $0x3b8] sm:$0xff]
    %v1233 = vld [vmem:[%s1 + $0x3c0] sm:$0xff]
    %v1234 = vld [vmem:[%s1 + $0x3c8] sm:$0xff]
    %v1235 = vld [vmem:[%s1 + $0x3d0] sm:$0xff]
    %v1236 = vld [vmem:[%s1 + $0x3d8] sm:$0xff]
    %v1237 = vld [vmem:[%s1 + $0x3e0] sm:$0xff]
    %1238 = vmatprep.subr.mxu0 0.0
    %1239 = vmatpush1.msra.mxu0 %v1237
    %1240 = vmatprep.subr.mxu0 0.0
    %1241 = vmatpush1.msra.mxu0 %v1236
    %1242 = vmatprep.subr.mxu0 0.0
    %1243 = vmatpush1.msra.mxu0 %v1235
    %1244 = vmatprep.subr.mxu0 0.0
    %1245 = vmatpush1.msra.mxu0 %v1234
    %1246 = vmatprep.subr.mxu0 0.0
    %1247 = vmatpush1.msra.mxu0 %v1233
    %1248 = vmatprep.subr.mxu0 0.0
    %1249 = vmatpush1.msra.mxu0 %v1232
    %1250 = vmatprep.subr.mxu0 0.0
    %1251 = vmatpush1.msra.mxu0 %v1231
    %1252 = vmatprep.subr.mxu0 0.0
    %1253 = vmatpush1.msra.mxu0 %v1230
    %1254 = vmatprep.subr.mxu0 0.0
    %1255 = vmatpush1.msra.mxu0 %v1229
    %1256 = vmatprep.subr.mxu0 0.0
    %1257 = vmatpush1.msra.mxu0 %v1228
    %1258 = vmatprep.subr.mxu0 0.0
    %1259 = vmatpush1.msra.mxu0 %v1227
    %1260 = vmatprep.subr.mxu0 0.0
    %1261 = vmatpush1.msra.mxu0 %v1226
    %1262 = vmatprep.subr.mxu0 0.0
    %1263 = vmatpush1.msra.mxu0 %v1225
    %1264 = vmatprep.subr.mxu0 0.0
    %1265 = vmatpush1.msra.mxu0 %v1224
    %1266 = vmatprep.subr.mxu0 0.0
    %1267 = vmatpush1.msra.mxu0 %v1223
    %1268 = vmatprep.subr.mxu0 0.0
    %1269 = vmatpush1.msra.mxu0 %v1222
    %1270 = vmatprep.subr.mxu0 0.0
    %1271 = vmatpush2.msra.mxu0 0.0
    %1272 = vmatprep.subr.mxu0 0.0
    %1273 = vmatpush2.msra.mxu0 0.0
    %1274 = vmatprep.subr.mxu0 0.0
    %1275 = vmatpush2.msra.mxu0 0.0
    %1276 = vmatprep.subr.mxu0 0.0
    %1277 = vmatpush2.msra.mxu0 0.0
    %1278 = vmatprep.subr.mxu0 0.0
    %1279 = vmatpush2.msra.mxu0 0.0
    %1280 = vmatprep.subr.mxu0 0.0
    %1281 = vmatpush2.msra.mxu0 0.0
    %1282 = vmatprep.subr.mxu0 0.0
    %1283 = vmatpush2.msra.mxu0 0.0
    %1284 = vmatprep.subr.mxu0 0.0
    %1285 = vmatpush2.msra.mxu0 0.0
    %1286 = vmatprep.subr.mxu0 0.0
    %1287 = vmatpush2.msra.mxu0 0.0
    %1288 = vmatprep.subr.mxu0 0.0
    %1289 = vmatpush2.msra.mxu0 0.0
    %1290 = vmatprep.subr.mxu0 0.0
    %1291 = vmatpush2.msra.mxu0 0.0
    %1292 = vmatprep.subr.mxu0 0.0
    %1293 = vmatpush2.msra.mxu0 0.0
    %1294 = vmatprep.subr.mxu0 0.0
    %1295 = vmatpush2.msra.mxu0 0.0
    %1296 = vmatprep.subr.mxu0 0.0
    %1297 = vmatpush2.msra.mxu0 0.0
    %1298 = vmatprep.subr.mxu0 0.0
    %1299 = vmatpush2.msra.mxu0 0.0
    %1300 = vmatprep.subr.mxu0 0.0
    %1301 = vmatpush2.msra.mxu0 0.0
    %1302 = vmatprep.mubr.f32.mxu0 0.0
    %1303 = vmatmul.mubr.f32.gmra.mxu0 %v1221
    %v1304 = vpop.f32.mrf.mxu0
    %v1305 = vadd.f32 0.0, %v1304
    %v1306 = vpop.f32.mrf.mxu0
    %1307 = vdwg.mxu0
    %v1308 = vrcp.pop 512.0
    %v1309 = vmul.f32 %v1305, %v1308
    %v1310 = vmul.f32 %v1309, %v1309
    %v1312 = vrot.slane %v1310, 7
    %v1314 = vsub.f32 %v1309, %v1312
    %v1315 = vld [vmem:[%s1 + $0x3e8] sm:$0x3]
    %v1316 = vadd.f32 %v1314, 1e-05
    %v1317 = vrsqrt.pop %v1316
    %v1319 = vrot.slane %v1315, 7
    %v1321 = vmul.f32 %v1317, %v1319
    %v1323 = vrot.slane %v1321, 1
    %v1325 = vmul.f32 %v1309, %v1323
    %v1327 = vrot.slane %v1325, 7
    %v1329 = vsub.f32 %v1315, %v1327
    %v1330 = vlaneseq
    %v1331 = vshrl.u32 %v1330, 7
    %v1332 = vsub.s32 1, %v1331
    %v1333 = vrot.slane %v1321, %v1332
    %v1334 = vmul.f32 %v951, %v1333
    %v1335 = vmul.f32 %v956, %v1333
    %v1336 = vmul.f32 %v961, %v1333
    %v1337 = vmul.f32 %v966, %v1333
    %v1338 = vlaneseq
    %v1339 = vshrl.u32 %v1338, 7
    %v1340 = vsub.s32 1, %v1339
    %v1341 = vrot.slane %v1329, %v1340
    %v1342 = vadd.f32 %v1334, %v1341
    %v1343 = vadd.f32 %v1335, %v1341
    %v1344 = vadd.f32 %v1336, %v1341
    %v1345 = vadd.f32 %v1337, %v1341
    %v1346 = vmul.f32 %v1157, %v1333
    %v1347 = vmul.f32 %v1162, %v1333
    %v1348 = vmul.f32 %v1167, %v1333
    %v1349 = vmul.f32 %v1172, %v1333
    %v1350 = vadd.f32 %v1346, %v1341
    %v1351 = vadd.f32 %v1347, %v1341
    %v1352 = vadd.f32 %v1348, %v1341
    %v1353 = vadd.f32 %v1349, %v1341
    %v1354 = vmax.f32 %v1342, %v1350
    %v1355 = vmax.f32 %v1343, %v1351
    %v1356 = vmax.f32 %v1344, %v1352
    %v1357 = vmax.f32 %v1345, %v1353
    %v1358 = vmax.f32 %v1354, %v1356
    %v1359 = vmax.f32 %v1355, %v1357
    %v1362 = vrot.slane %v1359, 7
    %vm1363 = vcmask 1041409
    %v1364 = vsel %vm1363, %v1362, %v1358
    %v1366 = vrot.slane %v1358, 1
    %v1367 = vsel %vm1363, %v1359, %v1366
    %v1369 = vrot.slane %v1358, 2
    %v1370 = vrot.slane %v1359, 1
    %v1371 = vsel %vm1363, %v1370, %v1369
    %v1373 = vrot.slane %v1358, 3
    %v1374 = vrot.slane %v1359, 2
    %v1375 = vsel %vm1363, %v1374, %v1373
    %v1377 = vrot.slane %v1358, 4
    %v1378 = vrot.slane %v1359, 3
    %v1379 = vsel %vm1363, %v1378, %v1377
    %v1381 = vrot.slane %v1358, 5
    %v1382 = vrot.slane %v1359, 4
    %v1383 = vsel %vm1363, %v1382, %v1381
    %v1385 = vrot.slane %v1358, 6
    %v1386 = vrot.slane %v1359, 5
    %v1387 = vsel %vm1363, %v1386, %v1385
    %v1389 = vrot.slane %v1358, 7
    %v1390 = vrot.slane %v1359, 6
    %v1391 = vsel %vm1363, %v1390, %v1389
    %v1393 = vld [vmem:[%s1 + $0x3f0] sm:$0xff]
    %v1394 = vld [vmem:[%s1 + $0x3f8] sm:$0xff]
    %v1395 = vld [vmem:[%s1 + $0x400] sm:$0xff]
    %v1396 = vld [vmem:[%s1 + $0x408] sm:$0xff]
    %v1397 = vld [vmem:[%s1 + $0x410] sm:$0xff]
    %v1398 = vld [vmem:[%s1 + $0x418] sm:$0xff]
    %v1399 = vld [vmem:[%s1 + $0x420] sm:$0xff]
    %v1400 = vld [vmem:[%s1 + $0x428] sm:$0xff]
    %v1401 = vld [vmem:[%s1 + $0x430] sm:$0xff]
    %v1402 = vld [vmem:[%s1 + $0x438] sm:$0xff]
    %v1403 = vld [vmem:[%s1 + $0x440] sm:$0xff]
    %v1404 = vld [vmem:[%s1 + $0x448] sm:$0xff]
    %v1405 = vld [vmem:[%s1 + $0x450] sm:$0xff]
    %v1406 = vld [vmem:[%s1 + $0x458] sm:$0xff]
    %v1407 = vld [vmem:[%s1 + $0x460] sm:$0xff]
    %v1408 = vld [vmem:[%s1 + $0x468] sm:$0xff]
    %v1409 = vld [vmem:[%s1 + $0x470] sm:$0xff]
    %v1410 = vld [vmem:[%s1 + $0x478] sm:$0xff]
    %v1411 = vld [vmem:[%s1 + $0x480] sm:$0xff]
    %v1412 = vld [vmem:[%s1 + $0x488] sm:$0xff]
    %v1413 = vld [vmem:[%s1 + $0x490] sm:$0xff]
    %v1414 = vld [vmem:[%s1 + $0x498] sm:$0xff]
    %v1415 = vld [vmem:[%s1 + $0x4a0] sm:$0xff]
    %v1416 = vld [vmem:[%s1 + $0x4a8] sm:$0xff]
    %v1417 = vld [vmem:[%s1 + $0x4b0] sm:$0xff]
    %v1418 = vld [vmem:[%s1 + $0x4b8] sm:$0xff]
    %v1419 = vld [vmem:[%s1 + $0x4c0] sm:$0xff]
    %v1420 = vld [vmem:[%s1 + $0x4c8] sm:$0xff]
    %v1421 = vld [vmem:[%s1 + $0x4d0] sm:$0xff]
    %v1422 = vld [vmem:[%s1 + $0x4d8] sm:$0xff]
    %v1423 = vld [vmem:[%s1 + $0x4e0] sm:$0xff]
    %v1424 = vld [vmem:[%s1 + $0x4e8] sm:$0xff]
    %v1425 = vld [vmem:[%s1 + $0x4f0] sm:$0xff]
    %v1426 = vld [vmem:[%s1 + $0x4f8] sm:$0xff]
    %v1427 = vld [vmem:[%s1 + $0x500] sm:$0xff]
    %v1428 = vld [vmem:[%s1 + $0x508] sm:$0xff]
    %v1429 = vld [vmem:[%s1 + $0x510] sm:$0xff]
    %v1430 = vld [vmem:[%s1 + $0x518] sm:$0xff]
    %v1431 = vld [vmem:[%s1 + $0x520] sm:$0xff]
    %v1432 = vld [vmem:[%s1 + $0x528] sm:$0xff]
    %v1433 = vld [vmem:[%s1 + $0x530] sm:$0xff]
    %v1434 = vld [vmem:[%s1 + $0x538] sm:$0xff]
    %v1435 = vld [vmem:[%s1 + $0x540] sm:$0xff]
    %v1436 = vld [vmem:[%s1 + $0x548] sm:$0xff]
    %v1437 = vld [vmem:[%s1 + $0x550] sm:$0xff]
    %v1438 = vld [vmem:[%s1 + $0x558] sm:$0xff]
    %v1439 = vld [vmem:[%s1 + $0x560] sm:$0xff]
    %v1440 = vld [vmem:[%s1 + $0x568] sm:$0xff]
    %v1441 = vld [vmem:[%s1 + $0x570] sm:$0xff]
    %v1442 = vld [vmem:[%s1 + $0x578] sm:$0xff]
    %v1443 = vld [vmem:[%s1 + $0x580] sm:$0xff]
    %v1444 = vld [vmem:[%s1 + $0x588] sm:$0xff]
    %v1445 = vld [vmem:[%s1 + $0x590] sm:$0xff]
    %v1446 = vld [vmem:[%s1 + $0x598] sm:$0xff]
    %v1447 = vld [vmem:[%s1 + $0x5a0] sm:$0xff]
    %v1448 = vld [vmem:[%s1 + $0x5a8] sm:$0xff]
    %v1449 = vld [vmem:[%s1 + $0x5b0] sm:$0xff]
    %v1450 = vld [vmem:[%s1 + $0x5b8] sm:$0xff]
    %v1451 = vld [vmem:[%s1 + $0x5c0] sm:$0xff]
    %v1452 = vld [vmem:[%s1 + $0x5c8] sm:$0xff]
    %v1453 = vld [vmem:[%s1 + $0x5d0] sm:$0xff]
    %v1454 = vld [vmem:[%s1 + $0x5d8] sm:$0xff]
    %v1455 = vld [vmem:[%s1 + $0x5e0] sm:$0xff]
    %v1456 = vld [vmem:[%s1 + $0x5e8] sm:$0xff]
    %v1457 = vld [vmem:[%s1 + $0x5f0] sm:$0xff]
    %v1458 = vld [vmem:[%s1 + $0x5f8] sm:$0xff]
    %v1459 = vld [vmem:[%s1 + $0x600] sm:$0xff]
    %v1460 = vld [vmem:[%s1 + $0x608] sm:$0xff]
    %v1461 = vld [vmem:[%s1 + $0x610] sm:$0xff]
    %v1462 = vld [vmem:[%s1 + $0x618] sm:$0xff]
    %v1463 = vld [vmem:[%s1 + $0x620] sm:$0xff]
    %v1464 = vld [vmem:[%s1 + $0x628] sm:$0xff]
    %v1465 = vld [vmem:[%s1 + $0x630] sm:$0xff]
    %v1466 = vld [vmem:[%s1 + $0x638] sm:$0xff]
    %v1467 = vld [vmem:[%s1 + $0x640] sm:$0xff]
    %v1468 = vld [vmem:[%s1 + $0x648] sm:$0xff]
    %v1469 = vld [vmem:[%s1 + $0x650] sm:$0xff]
    %v1470 = vld [vmem:[%s1 + $0x658] sm:$0xff]
    %v1471 = vld [vmem:[%s1 + $0x660] sm:$0xff]
    %v1472 = vld [vmem:[%s1 + $0x668] sm:$0xff]
    %v1473 = vld [vmem:[%s1 + $0x670] sm:$0xff]
    %v1474 = vld [vmem:[%s1 + $0x678] sm:$0xff]
    %v1475 = vld [vmem:[%s1 + $0x680] sm:$0xff]
    %v1476 = vld [vmem:[%s1 + $0x688] sm:$0xff]
    %v1477 = vld [vmem:[%s1 + $0x690] sm:$0xff]
    %v1478 = vld [vmem:[%s1 + $0x698] sm:$0xff]
    %v1479 = vld [vmem:[%s1 + $0x6a0] sm:$0xff]
    %v1480 = vld [vmem:[%s1 + $0x6a8] sm:$0xff]
    %v1481 = vld [vmem:[%s1 + $0x6b0] sm:$0xff]
    %v1482 = vld [vmem:[%s1 + $0x6b8] sm:$0xff]
    %v1483 = vld [vmem:[%s1 + $0x6c0] sm:$0xff]
    %v1484 = vld [vmem:[%s1 + $0x6c8] sm:$0xff]
    %v1485 = vld [vmem:[%s1 + $0x6d0] sm:$0xff]
    %v1486 = vld [vmem:[%s1 + $0x6d8] sm:$0xff]
    %v1487 = vld [vmem:[%s1 + $0x6e0] sm:$0xff]
    %v1488 = vld [vmem:[%s1 + $0x6e8] sm:$0xff]
    %v1489 = vld [vmem:[%s1 + $0x6f0] sm:$0xff]
    %v1490 = vld [vmem:[%s1 + $0x6f8] sm:$0xff]
    %v1491 = vld [vmem:[%s1 + $0x700] sm:$0xff]
    %v1492 = vld [vmem:[%s1 + $0x708] sm:$0xff]
    %v1493 = vld [vmem:[%s1 + $0x710] sm:$0xff]
    %v1494 = vld [vmem:[%s1 + $0x718] sm:$0xff]
    %v1495 = vld [vmem:[%s1 + $0x720] sm:$0xff]
    %v1496 = vld [vmem:[%s1 + $0x728] sm:$0xff]
    %v1497 = vld [vmem:[%s1 + $0x730] sm:$0xff]
    %v1498 = vld [vmem:[%s1 + $0x738] sm:$0xff]
    %v1499 = vld [vmem:[%s1 + $0x740] sm:$0xff]
    %v1500 = vld [vmem:[%s1 + $0x748] sm:$0xff]
    %v1501 = vld [vmem:[%s1 + $0x750] sm:$0xff]
    %v1502 = vld [vmem:[%s1 + $0x758] sm:$0xff]
    %v1503 = vld [vmem:[%s1 + $0x760] sm:$0xff]
    %v1504 = vld [vmem:[%s1 + $0x768] sm:$0xff]
    %v1505 = vld [vmem:[%s1 + $0x770] sm:$0xff]
    %v1506 = vld [vmem:[%s1 + $0x778] sm:$0xff]
    %v1507 = vld [vmem:[%s1 + $0x780] sm:$0xff]
    %v1508 = vld [vmem:[%s1 + $0x788] sm:$0xff]
    %v1509 = vld [vmem:[%s1 + $0x790] sm:$0xff]
    %v1510 = vld [vmem:[%s1 + $0x798] sm:$0xff]
    %v1511 = vld [vmem:[%s1 + $0x7a0] sm:$0xff]
    %v1512 = vld [vmem:[%s1 + $0x7a8] sm:$0xff]
    %v1513 = vld [vmem:[%s1 + $0x7b0] sm:$0xff]
    %v1514 = vld [vmem:[%s1 + $0x7b8] sm:$0xff]
    %v1515 = vld [vmem:[%s1 + $0x7c0] sm:$0xff]
    %v1516 = vld [vmem:[%s1 + $0x7c8] sm:$0xff]
    %v1517 = vld [vmem:[%s1 + $0x7d0] sm:$0xff]
    %v1518 = vld [vmem:[%s1 + $0x7d8] sm:$0xff]
    %v1519 = vld [vmem:[%s1 + $0x7e0] sm:$0xff]
    %v1520 = vld [vmem:[%s1 + $0x7e8] sm:$0xff]
    %v1521 = vld [vmem:[%s1 + $0x7f0] sm:$0x1]
    %v1522 = vlaneseq
    %v1523 = vshrl.u32 %v1522, 7
    %v1524 = vsub.s32 0, %v1523
    %v1525 = vrot.slane %v1521, %v1524
    %1526 = vmatprep.subr.mxu0 0.0
    %1527 = vmatpush1.msra.mxu0 %v1408
    %1528 = vmatprep.subr.mxu0 0.0
    %1529 = vmatpush1.msra.mxu0 %v1407
    %1530 = vmatprep.subr.mxu0 0.0
    %1531 = vmatpush1.msra.mxu0 %v1406
    %1532 = vmatprep.subr.mxu0 0.0
    %1533 = vmatpush1.msra.mxu0 %v1405
    %1534 = vmatprep.subr.mxu0 0.0
    %1535 = vmatpush1.msra.mxu0 %v1404
    %1536 = vmatprep.subr.mxu0 0.0
    %1537 = vmatpush1.msra.mxu0 %v1403
    %1538 = vmatprep.subr.mxu0 0.0
    %1539 = vmatpush1.msra.mxu0 %v1402
    %1540 = vmatprep.subr.mxu0 0.0
    %1541 = vmatpush1.msra.mxu0 %v1401
    %1542 = vmatprep.subr.mxu0 0.0
    %1543 = vmatpush1.msra.mxu0 %v1400
    %1544 = vmatprep.subr.mxu0 0.0
    %1545 = vmatpush1.msra.mxu0 %v1399
    %1546 = vmatprep.subr.mxu0 0.0
    %1547 = vmatpush1.msra.mxu0 %v1398
    %1548 = vmatprep.subr.mxu0 0.0
    %1549 = vmatpush1.msra.mxu0 %v1397
    %1550 = vmatprep.subr.mxu0 0.0
    %1551 = vmatpush1.msra.mxu0 %v1396
    %1552 = vmatprep.subr.mxu0 0.0
    %1553 = vmatpush1.msra.mxu0 %v1395
    %1554 = vmatprep.subr.mxu0 0.0
    %1555 = vmatpush1.msra.mxu0 %v1394
    %1556 = vmatprep.subr.mxu0 0.0
    %1557 = vmatpush1.msra.mxu0 %v1393
    %1558 = vmatprep.subr.mxu0 0.0
    %1559 = vmatpush2.msra.mxu0 %v1424
    %1560 = vmatprep.subr.mxu0 0.0
    %1561 = vmatpush2.msra.mxu0 %v1423
    %1562 = vmatprep.subr.mxu0 0.0
    %1563 = vmatpush2.msra.mxu0 %v1422
    %1564 = vmatprep.subr.mxu0 0.0
    %1565 = vmatpush2.msra.mxu0 %v1421
    %1566 = vmatprep.subr.mxu0 0.0
    %1567 = vmatpush2.msra.mxu0 %v1420
    %1568 = vmatprep.subr.mxu0 0.0
    %1569 = vmatpush2.msra.mxu0 %v1419
    %1570 = vmatprep.subr.mxu0 0.0
    %1571 = vmatpush2.msra.mxu0 %v1418
    %1572 = vmatprep.subr.mxu0 0.0
    %1573 = vmatpush2.msra.mxu0 %v1417
    %1574 = vmatprep.subr.mxu0 0.0
    %1575 = vmatpush2.msra.mxu0 %v1416
    %1576 = vmatprep.subr.mxu0 0.0
    %1577 = vmatpush2.msra.mxu0 %v1415
    %1578 = vmatprep.subr.mxu0 0.0
    %1579 = vmatpush2.msra.mxu0 %v1414
    %1580 = vmatprep.subr.mxu0 0.0
    %1581 = vmatpush2.msra.mxu0 %v1413
    %1582 = vmatprep.subr.mxu0 0.0
    %1583 = vmatpush2.msra.mxu0 %v1412
    %1584 = vmatprep.subr.mxu0 0.0
    %1585 = vmatpush2.msra.mxu0 %v1411
    %1586 = vmatprep.subr.mxu0 0.0
    %1587 = vmatpush2.msra.mxu0 %v1410
    %1588 = vmatprep.subr.mxu0 0.0
    %1589 = vmatpush2.msra.mxu0 %v1409
    %1590 = vmatprep.mubr.f32.mxu0 %v1367
    %1591 = vmatmul.mubr.f32.gmra.mxu0 %v1364
    %v1592 = vpop.f32.mrf.mxu0
    %v1593 = vadd.f32 %v1525, %v1592
    %v1594 = vpop.f32.mrf.mxu0
    %1595 = vdwg.mxu0
    %1596 = vmatprep.subr.mxu0 0.0
    %1597 = vmatpush1.msra.mxu0 %v1440
    %1598 = vmatprep.subr.mxu0 0.0
    %1599 = vmatpush1.msra.mxu0 %v1439
    %1600 = vmatprep.subr.mxu0 0.0
    %1601 = vmatpush1.msra.mxu0 %v1438
    %1602 = vmatprep.subr.mxu0 0.0
    %1603 = vmatpush1.msra.mxu0 %v1437
    %1604 = vmatprep.subr.mxu0 0.0
    %1605 = vmatpush1.msra.mxu0 %v1436
    %1606 = vmatprep.subr.mxu0 0.0
    %1607 = vmatpush1.msra.mxu0 %v1435
    %1608 = vmatprep.subr.mxu0 0.0
    %1609 = vmatpush1.msra.mxu0 %v1434
    %1610 = vmatprep.subr.mxu0 0.0
    %1611 = vmatpush1.msra.mxu0 %v1433
    %1612 = vmatprep.subr.mxu0 0.0
    %1613 = vmatpush1.msra.mxu0 %v1432
    %1614 = vmatprep.subr.mxu0 0.0
    %1615 = vmatpush1.msra.mxu0 %v1431
    %1616 = vmatprep.subr.mxu0 0.0
    %1617 = vmatpush1.msra.mxu0 %v1430
    %1618 = vmatprep.subr.mxu0 0.0
    %1619 = vmatpush1.msra.mxu0 %v1429
    %1620 = vmatprep.subr.mxu0 0.0
    %1621 = vmatpush1.msra.mxu0 %v1428
    %1622 = vmatprep.subr.mxu0 0.0
    %1623 = vmatpush1.msra.mxu0 %v1427
    %1624 = vmatprep.subr.mxu0 0.0
    %1625 = vmatpush1.msra.mxu0 %v1426
    %1626 = vmatprep.subr.mxu0 0.0
    %1627 = vmatpush1.msra.mxu0 %v1425
    %1628 = vmatprep.subr.mxu0 0.0
    %1629 = vmatpush2.msra.mxu0 %v1456
    %1630 = vmatprep.subr.mxu0 0.0
    %1631 = vmatpush2.msra.mxu0 %v1455
    %1632 = vmatprep.subr.mxu0 0.0
    %1633 = vmatpush2.msra.mxu0 %v1454
    %1634 = vmatprep.subr.mxu0 0.0
    %1635 = vmatpush2.msra.mxu0 %v1453
    %1636 = vmatprep.subr.mxu0 0.0
    %1637 = vmatpush2.msra.mxu0 %v1452
    %1638 = vmatprep.subr.mxu0 0.0
    %1639 = vmatpush2.msra.mxu0 %v1451
    %1640 = vmatprep.subr.mxu0 0.0
    %1641 = vmatpush2.msra.mxu0 %v1450
    %1642 = vmatprep.subr.mxu0 0.0
    %1643 = vmatpush2.msra.mxu0 %v1449
    %1644 = vmatprep.subr.mxu0 0.0
    %1645 = vmatpush2.msra.mxu0 %v1448
    %1646 = vmatprep.subr.mxu0 0.0
    %1647 = vmatpush2.msra.mxu0 %v1447
    %1648 = vmatprep.subr.mxu0 0.0
    %1649 = vmatpush2.msra.mxu0 %v1446
    %1650 = vmatprep.subr.mxu0 0.0
    %1651 = vmatpush2.msra.mxu0 %v1445
    %1652 = vmatprep.subr.mxu0 0.0
    %1653 = vmatpush2.msra.mxu0 %v1444
    %1654 = vmatprep.subr.mxu0 0.0
    %1655 = vmatpush2.msra.mxu0 %v1443
    %1656 = vmatprep.subr.mxu0 0.0
    %1657 = vmatpush2.msra.mxu0 %v1442
    %1658 = vmatprep.subr.mxu0 0.0
    %1659 = vmatpush2.msra.mxu0 %v1441
    %1660 = vmatprep.mubr.f32.mxu0 %v1375
    %1661 = vmatmul.mubr.f32.gmra.mxu0 %v1371
    %v1662 = vpop.f32.mrf.mxu0
    %v1663 = vadd.f32 %v1593, %v1662
    %v1664 = vpop.f32.mrf.mxu0
    %1665 = vdwg.mxu0
    %1666 = vmatprep.subr.mxu0 0.0
    %1667 = vmatpush1.msra.mxu0 %v1472
    %1668 = vmatprep.subr.mxu0 0.0
    %1669 = vmatpush1.msra.mxu0 %v1471
    %1670 = vmatprep.subr.mxu0 0.0
    %1671 = vmatpush1.msra.mxu0 %v1470
    %1672 = vmatprep.subr.mxu0 0.0
    %1673 = vmatpush1.msra.mxu0 %v1469
    %1674 = vmatprep.subr.mxu0 0.0
    %1675 = vmatpush1.msra.mxu0 %v1468
    %1676 = vmatprep.subr.mxu0 0.0
    %1677 = vmatpush1.msra.mxu0 %v1467
    %1678 = vmatprep.subr.mxu0 0.0
    %1679 = vmatpush1.msra.mxu0 %v1466
    %1680 = vmatprep.subr.mxu0 0.0
    %1681 = vmatpush1.msra.mxu0 %v1465
    %1682 = vmatprep.subr.mxu0 0.0
    %1683 = vmatpush1.msra.mxu0 %v1464
    %1684 = vmatprep.subr.mxu0 0.0
    %1685 = vmatpush1.msra.mxu0 %v1463
    %1686 = vmatprep.subr.mxu0 0.0
    %1687 = vmatpush1.msra.mxu0 %v1462
    %1688 = vmatprep.subr.mxu0 0.0
    %1689 = vmatpush1.msra.mxu0 %v1461
    %1690 = vmatprep.subr.mxu0 0.0
    %1691 = vmatpush1.msra.mxu0 %v1460
    %1692 = vmatprep.subr.mxu0 0.0
    %1693 = vmatpush1.msra.mxu0 %v1459
    %1694 = vmatprep.subr.mxu0 0.0
    %1695 = vmatpush1.msra.mxu0 %v1458
    %1696 = vmatprep.subr.mxu0 0.0
    %1697 = vmatpush1.msra.mxu0 %v1457
    %1698 = vmatprep.subr.mxu0 0.0
    %1699 = vmatpush2.msra.mxu0 %v1488
    %1700 = vmatprep.subr.mxu0 0.0
    %1701 = vmatpush2.msra.mxu0 %v1487
    %1702 = vmatprep.subr.mxu0 0.0
    %1703 = vmatpush2.msra.mxu0 %v1486
    %1704 = vmatprep.subr.mxu0 0.0
    %1705 = vmatpush2.msra.mxu0 %v1485
    %1706 = vmatprep.subr.mxu0 0.0
    %1707 = vmatpush2.msra.mxu0 %v1484
    %1708 = vmatprep.subr.mxu0 0.0
    %1709 = vmatpush2.msra.mxu0 %v1483
    %1710 = vmatprep.subr.mxu0 0.0
    %1711 = vmatpush2.msra.mxu0 %v1482
    %1712 = vmatprep.subr.mxu0 0.0
    %1713 = vmatpush2.msra.mxu0 %v1481
    %1714 = vmatprep.subr.mxu0 0.0
    %1715 = vmatpush2.msra.mxu0 %v1480
    %1716 = vmatprep.subr.mxu0 0.0
    %1717 = vmatpush2.msra.mxu0 %v1479
    %1718 = vmatprep.subr.mxu0 0.0
    %1719 = vmatpush2.msra.mxu0 %v1478
    %1720 = vmatprep.subr.mxu0 0.0
    %1721 = vmatpush2.msra.mxu0 %v1477
    %1722 = vmatprep.subr.mxu0 0.0
    %1723 = vmatpush2.msra.mxu0 %v1476
    %1724 = vmatprep.subr.mxu0 0.0
    %1725 = vmatpush2.msra.mxu0 %v1475
    %1726 = vmatprep.subr.mxu0 0.0
    %1727 = vmatpush2.msra.mxu0 %v1474
    %1728 = vmatprep.subr.mxu0 0.0
    %1729 = vmatpush2.msra.mxu0 %v1473
    %1730 = vmatprep.mubr.f32.mxu0 %v1383
    %1731 = vmatmul.mubr.f32.gmra.mxu0 %v1379
    %v1732 = vpop.f32.mrf.mxu0
    %v1733 = vadd.f32 %v1663, %v1732
    %v1734 = vpop.f32.mrf.mxu0
    %1735 = vdwg.mxu0
    %1736 = vmatprep.subr.mxu0 0.0
    %1737 = vmatpush1.msra.mxu0 %v1504
    %1738 = vmatprep.subr.mxu0 0.0
    %1739 = vmatpush1.msra.mxu0 %v1503
    %1740 = vmatprep.subr.mxu0 0.0
    %1741 = vmatpush1.msra.mxu0 %v1502
    %1742 = vmatprep.subr.mxu0 0.0
    %1743 = vmatpush1.msra.mxu0 %v1501
    %1744 = vmatprep.subr.mxu0 0.0
    %1745 = vmatpush1.msra.mxu0 %v1500
    %1746 = vmatprep.subr.mxu0 0.0
    %1747 = vmatpush1.msra.mxu0 %v1499
    %1748 = vmatprep.subr.mxu0 0.0
    %1749 = vmatpush1.msra.mxu0 %v1498
    %1750 = vmatprep.subr.mxu0 0.0
    %1751 = vmatpush1.msra.mxu0 %v1497
    %1752 = vmatprep.subr.mxu0 0.0
    %1753 = vmatpush1.msra.mxu0 %v1496
    %1754 = vmatprep.subr.mxu0 0.0
    %1755 = vmatpush1.msra.mxu0 %v1495
    %1756 = vmatprep.subr.mxu0 0.0
    %1757 = vmatpush1.msra.mxu0 %v1494
    %1758 = vmatprep.subr.mxu0 0.0
    %1759 = vmatpush1.msra.mxu0 %v1493
    %1760 = vmatprep.subr.mxu0 0.0
    %1761 = vmatpush1.msra.mxu0 %v1492
    %1762 = vmatprep.subr.mxu0 0.0
    %1763 = vmatpush1.msra.mxu0 %v1491
    %1764 = vmatprep.subr.mxu0 0.0
    %1765 = vmatpush1.msra.mxu0 %v1490
    %1766 = vmatprep.subr.mxu0 0.0
    %1767 = vmatpush1.msra.mxu0 %v1489
    %1768 = vmatprep.subr.mxu0 0.0
    %1769 = vmatpush2.msra.mxu0 %v1520
    %1770 = vmatprep.subr.mxu0 0.0
    %1771 = vmatpush2.msra.mxu0 %v1519
    %1772 = vmatprep.subr.mxu0 0.0
    %1773 = vmatpush2.msra.mxu0 %v1518
    %1774 = vmatprep.subr.mxu0 0.0
    %1775 = vmatpush2.msra.mxu0 %v1517
    %1776 = vmatprep.subr.mxu0 0.0
    %1777 = vmatpush2.msra.mxu0 %v1516
    %1778 = vmatprep.subr.mxu0 0.0
    %1779 = vmatpush2.msra.mxu0 %v1515
    %1780 = vmatprep.subr.mxu0 0.0
    %1781 = vmatpush2.msra.mxu0 %v1514
    %1782 = vmatprep.subr.mxu0 0.0
    %1783 = vmatpush2.msra.mxu0 %v1513
    %1784 = vmatprep.subr.mxu0 0.0
    %1785 = vmatpush2.msra.mxu0 %v1512
    %1786 = vmatprep.subr.mxu0 0.0
    %1787 = vmatpush2.msra.mxu0 %v1511
    %1788 = vmatprep.subr.mxu0 0.0
    %1789 = vmatpush2.msra.mxu0 %v1510
    %1790 = vmatprep.subr.mxu0 0.0
    %1791 = vmatpush2.msra.mxu0 %v1509
    %1792 = vmatprep.subr.mxu0 0.0
    %1793 = vmatpush2.msra.mxu0 %v1508
    %1794 = vmatprep.subr.mxu0 0.0
    %1795 = vmatpush2.msra.mxu0 %v1507
    %1796 = vmatprep.subr.mxu0 0.0
    %1797 = vmatpush2.msra.mxu0 %v1506
    %1798 = vmatprep.subr.mxu0 0.0
    %1799 = vmatpush2.msra.mxu0 %v1505
    %1800 = vmatprep.mubr.f32.mxu0 %v1391
    %1801 = vmatmul.mubr.f32.gmra.mxu0 %v1387
    %v1802 = vpop.f32.mrf.mxu0
    %v1803 = vadd.f32 %v1733, %v1802
    %v1804 = vpop.f32.mrf.mxu0
    %1805 = vdwg.mxu0
    %v1806 = vmax.f32 %v1803, 0.0
    %v1807 = vld [vmem:[%s1 + $0x7f8] sm:$0xff]
    %v1808 = vld [vmem:[%s1 + $0x800] sm:$0xff]
    %v1809 = vld [vmem:[%s1 + $0x808] sm:$0xff]
    %v1810 = vld [vmem:[%s1 + $0x810] sm:$0xff]
    %v1811 = vld [vmem:[%s1 + $0x818] sm:$0xff]
    %v1812 = vld [vmem:[%s1 + $0x820] sm:$0xff]
    %v1813 = vld [vmem:[%s1 + $0x828] sm:$0xff]
    %v1814 = vld [vmem:[%s1 + $0x830] sm:$0xff]
    %v1815 = vld [vmem:[%s1 + $0x838] sm:$0xff]
    %v1816 = vld [vmem:[%s1 + $0x840] sm:$0xff]
    %v1817 = vld [vmem:[%s1 + $0x848] sm:$0xff]
    %v1818 = vld [vmem:[%s1 + $0x850] sm:$0xff]
    %v1819 = vld [vmem:[%s1 + $0x858] sm:$0xff]
    %v1820 = vld [vmem:[%s1 + $0x860] sm:$0xff]
    %v1821 = vld [vmem:[%s1 + $0x868] sm:$0xff]
    %v1822 = vld [vmem:[%s1 + $0x870] sm:$0xff]
    %v1823 = vld [vmem:[%s1 + $0x878] sm:$0x1]
    %v1824 = vlaneseq
    %v1825 = vshrl.u32 %v1824, 7
    %v1826 = vsub.s32 0, %v1825
    %v1827 = vrot.slane %v1823, %v1826
    %1828 = vmatprep.subr.mxu0 0.0
    %1829 = vmatpush1.msra.mxu0 %v1822
    %1830 = vmatprep.subr.mxu0 0.0
    %1831 = vmatpush1.msra.mxu0 %v1821
    %1832 = vmatprep.subr.mxu0 0.0
    %1833 = vmatpush1.msra.mxu0 %v1820
    %1834 = vmatprep.subr.mxu0 0.0
    %1835 = vmatpush1.msra.mxu0 %v1819
    %1836 = vmatprep.subr.mxu0 0.0
    %1837 = vmatpush1.msra.mxu0 %v1818
    %1838 = vmatprep.subr.mxu0 0.0
    %1839 = vmatpush1.msra.mxu0 %v1817
    %1840 = vmatprep.subr.mxu0 0.0
    %1841 = vmatpush1.msra.mxu0 %v1816
    %1842 = vmatprep.subr.mxu0 0.0
    %1843 = vmatpush1.msra.mxu0 %v1815
    %1844 = vmatprep.subr.mxu0 0.0
    %1845 = vmatpush1.msra.mxu0 %v1814
    %1846 = vmatprep.subr.mxu0 0.0
    %1847 = vmatpush1.msra.mxu0 %v1813
    %1848 = vmatprep.subr.mxu0 0.0
    %1849 = vmatpush1.msra.mxu0 %v1812
    %1850 = vmatprep.subr.mxu0 0.0
    %1851 = vmatpush1.msra.mxu0 %v1811
    %1852 = vmatprep.subr.mxu0 0.0
    %1853 = vmatpush1.msra.mxu0 %v1810
    %1854 = vmatprep.subr.mxu0 0.0
    %1855 = vmatpush1.msra.mxu0 %v1809
    %1856 = vmatprep.subr.mxu0 0.0
    %1857 = vmatpush1.msra.mxu0 %v1808
    %1858 = vmatprep.subr.mxu0 0.0
    %1859 = vmatpush1.msra.mxu0 %v1807
    %1860 = vmatprep.subr.mxu0 0.0
    %1861 = vmatpush2.msra.mxu0 0.0
    %1862 = vmatprep.subr.mxu0 0.0
    %1863 = vmatpush2.msra.mxu0 0.0
    %1864 = vmatprep.subr.mxu0 0.0
    %1865 = vmatpush2.msra.mxu0 0.0
    %1866 = vmatprep.subr.mxu0 0.0
    %1867 = vmatpush2.msra.mxu0 0.0
    %1868 = vmatprep.subr.mxu0 0.0
    %1869 = vmatpush2.msra.mxu0 0.0
    %1870 = vmatprep.subr.mxu0 0.0
    %1871 = vmatpush2.msra.mxu0 0.0
    %1872 = vmatprep.subr.mxu0 0.0
    %1873 = vmatpush2.msra.mxu0 0.0
    %1874 = vmatprep.subr.mxu0 0.0
    %1875 = vmatpush2.msra.mxu0 0.0
    %1876 = vmatprep.subr.mxu0 0.0
    %1877 = vmatpush2.msra.mxu0 0.0
    %1878 = vmatprep.subr.mxu0 0.0
    %1879 = vmatpush2.msra.mxu0 0.0
    %1880 = vmatprep.subr.mxu0 0.0
    %1881 = vmatpush2.msra.mxu0 0.0
    %1882 = vmatprep.subr.mxu0 0.0
    %1883 = vmatpush2.msra.mxu0 0.0
    %1884 = vmatprep.subr.mxu0 0.0
    %1885 = vmatpush2.msra.mxu0 0.0
    %1886 = vmatprep.subr.mxu0 0.0
    %1887 = vmatpush2.msra.mxu0 0.0
    %1888 = vmatprep.subr.mxu0 0.0
    %1889 = vmatpush2.msra.mxu0 0.0
    %1890 = vmatprep.subr.mxu0 0.0
    %1891 = vmatpush2.msra.mxu0 0.0
    %1892 = vmatprep.mubr.f32.mxu0 0.0
    %1893 = vmatmul.mubr.f32.gmra.mxu0 %v1806
    %v1894 = vpop.f32.mrf.mxu0
    %v1895 = vadd.f32 %v1827, %v1894
    %v1896 = vpop.f32.mrf.mxu0
    %1897 = vdwg.mxu0
    %v1898 = vmax.f32 %v1895, 0.0
    %v1899 = vld [vmem:[%s1 + $0x880] sm:$0xff]
    %v1900 = vld [vmem:[%s1 + $0x888] sm:$0xff]
    %v1901 = vld [vmem:[%s1 + $0x890] sm:$0xff]
    %v1902 = vld [vmem:[%s1 + $0x898] sm:$0xff]
    %v1903 = vld [vmem:[%s1 + $0x8a0] sm:$0xff]
    %v1904 = vld [vmem:[%s1 + $0x8a8] sm:$0xff]
    %v1905 = vld [vmem:[%s1 + $0x8b0] sm:$0xff]
    %v1906 = vld [vmem:[%s1 + $0x8b8] sm:$0xff]
    %v1907 = vld [vmem:[%s1 + $0x8c0] sm:$0xff]
    %v1908 = vld [vmem:[%s1 + $0x8c8] sm:$0xff]
    %v1909 = vld [vmem:[%s1 + $0x8d0] sm:$0xff]
    %v1910 = vld [vmem:[%s1 + $0x8d8] sm:$0xff]
    %v1911 = vld [vmem:[%s1 + $0x8e0] sm:$0xff]
    %v1912 = vld [vmem:[%s1 + $0x8e8] sm:$0xff]
    %v1913 = vld [vmem:[%s1 + $0x8f0] sm:$0xff]
    %v1914 = vld [vmem:[%s1 + $0x8f8] sm:$0xff]
    %v1915 = vld [vmem:[%s1 + $0x900] sm:$0x1]
    %v1916 = vlaneseq
    %v1917 = vshrl.u32 %v1916, 7
    %v1918 = vsub.s32 0, %v1917
    %v1919 = vrot.slane %v1915, %v1918
    %1920 = vmatprep.subr.mxu0 0.0
    %1921 = vmatpush1.msra.mxu0 %v1914
    %1922 = vmatprep.subr.mxu0 0.0
    %1923 = vmatpush1.msra.mxu0 %v1913
    %1924 = vmatprep.subr.mxu0 0.0
    %1925 = vmatpush1.msra.mxu0 %v1912
    %1926 = vmatprep.subr.mxu0 0.0
    %1927 = vmatpush1.msra.mxu0 %v1911
    %1928 = vmatprep.subr.mxu0 0.0
    %1929 = vmatpush1.msra.mxu0 %v1910
    %1930 = vmatprep.subr.mxu0 0.0
    %1931 = vmatpush1.msra.mxu0 %v1909
    %1932 = vmatprep.subr.mxu0 0.0
    %1933 = vmatpush1.msra.mxu0 %v1908
    %1934 = vmatprep.subr.mxu0 0.0
    %1935 = vmatpush1.msra.mxu0 %v1907
    %1936 = vmatprep.subr.mxu0 0.0
    %1937 = vmatpush1.msra.mxu0 %v1906
    %1938 = vmatprep.subr.mxu0 0.0
    %1939 = vmatpush1.msra.mxu0 %v1905
    %1940 = vmatprep.subr.mxu0 0.0
    %1941 = vmatpush1.msra.mxu0 %v1904
    %1942 = vmatprep.subr.mxu0 0.0
    %1943 = vmatpush1.msra.mxu0 %v1903
    %1944 = vmatprep.subr.mxu0 0.0
    %1945 = vmatpush1.msra.mxu0 %v1902
    %1946 = vmatprep.subr.mxu0 0.0
    %1947 = vmatpush1.msra.mxu0 %v1901
    %1948 = vmatprep.subr.mxu0 0.0
    %1949 = vmatpush1.msra.mxu0 %v1900
    %1950 = vmatprep.subr.mxu0 0.0
    %1951 = vmatpush1.msra.mxu0 %v1899
    %1952 = vmatprep.subr.mxu0 0.0
    %1953 = vmatpush2.msra.mxu0 0.0
    %1954 = vmatprep.subr.mxu0 0.0
    %1955 = vmatpush2.msra.mxu0 0.0
    %1956 = vmatprep.subr.mxu0 0.0
    %1957 = vmatpush2.msra.mxu0 0.0
    %1958 = vmatprep.subr.mxu0 0.0
    %1959 = vmatpush2.msra.mxu0 0.0
    %1960 = vmatprep.subr.mxu0 0.0
    %1961 = vmatpush2.msra.mxu0 0.0
    %1962 = vmatprep.subr.mxu0 0.0
    %1963 = vmatpush2.msra.mxu0 0.0
    %1964 = vmatprep.subr.mxu0 0.0
    %1965 = vmatpush2.msra.mxu0 0.0
    %1966 = vmatprep.subr.mxu0 0.0
    %1967 = vmatpush2.msra.mxu0 0.0
    %1968 = vmatprep.subr.mxu0 0.0
    %1969 = vmatpush2.msra.mxu0 0.0
    %1970 = vmatprep.subr.mxu0 0.0
    %1971 = vmatpush2.msra.mxu0 0.0
    %1972 = vmatprep.subr.mxu0 0.0
    %1973 = vmatpush2.msra.mxu0 0.0
    %1974 = vmatprep.subr.mxu0 0.0
    %1975 = vmatpush2.msra.mxu0 0.0
    %1976 = vmatprep.subr.mxu0 0.0
    %1977 = vmatpush2.msra.mxu0 0.0
    %1978 = vmatprep.subr.mxu0 0.0
    %1979 = vmatpush2.msra.mxu0 0.0
    %1980 = vmatprep.subr.mxu0 0.0
    %1981 = vmatpush2.msra.mxu0 0.0
    %1982 = vmatprep.subr.mxu0 0.0
    %1983 = vmatpush2.msra.mxu0 0.0
    %1984 = vmatprep.mubr.f32.mxu0 0.0
    %1985 = vmatmul.mubr.f32.gmra.mxu0 %v1898
    %v1986 = vpop.f32.mrf.mxu0
    %v1987 = vadd.f32 %v1919, %v1986
    %v1988 = vpop.f32.mrf.mxu0
    %1989 = vdwg.mxu0
    %vm1990 = vcmask 74752
    %1991 = vst.msk [vmem:[#allocation4] sm:$0x3] %vm1990, %v1987
    // Predicated region
    $region10: #{lenet_forward.1} parent=1 // pred_check
      _
    $region11: #{lenet_forward.1} parent=1 // pred_check_branch
      %1993 = sbr.rel (0) target = $region13
    $region12: #{lenet_forward.1} parent=1 // pred_region
      %s1995 = ssub.s32 32, 32
      %1996 = vsyncadd [#allocation5], %s1995
      %s1998 = sshll.u32 [#allocation4], 4
      %s1999 = int_to_ptr.vmem [resolvable:$true] %s1998
      %2001 = dma.vmem_to_hbm [thread:$0]  %s1999, 32, %s2, [#allocation5]
    $region13: #{lenet_forward.1} parent=1 // pred_fallthru
      _
    // Predicated region
    $region14: #{lenet_forward.1} parent=1 // pred_check
      _
    $region15: #{lenet_forward.1} parent=1 // pred_check_branch
      %2003 = sbr.rel (0) target = $region17
    $region16: #{lenet_forward.1} parent=1 // pred_region
      %2004 = dma.done [#allocation5], 32
    $region17: #{lenet_forward.1} parent=1 // pred_fallthru
      _
    %2005 = vsyncpa [#allocation5], 1

</llo_original>
